<compile_context>
chip_gen: v7x
topology: tpu7x:2x2x1
jax: 0.10.0
libtpu: 0.0.40
codegen_flags: <defaults>
</compile_context>

<pallas_src>
import functools

import jax
import jax.numpy as jnp
from jax.experimental import pallas as pl
from jax.experimental.pallas import tpu as pltpu

# ----------------------------- config (small synthetic) -----------------------------
S = 8                      # num tokens
HIDDEN = 32                # hidden_size
NUM_HEADS = 4              # num_attention_heads
NUM_KV_HEADS = 2           # num_key_value_heads (GQA)
HEAD_DIM = HIDDEN // NUM_HEADS
INTERMEDIATE = 64          # intermediate_size
RMS_EPS = 1e-6
ROPE_THETA = 10000.0
Q_SIZE = NUM_HEADS * HEAD_DIM
KV_SIZE = NUM_KV_HEADS * HEAD_DIM
SCALE = HEAD_DIM ** -0.5


# ----------------------------------- fused kernel ------------------------------------
def _hat_layer_kernel(*refs, has_residual, eps, num_heads, num_kv_heads, head_dim,
                      matmul_dtype):
    if has_residual:
        (x_ref, res_ref, ln_in_ref, ln_post_ref, wq_ref, wk_ref, wv_ref,
         cos_ref, sin_ref, wo_ref, wg_ref, wu_ref, wd_ref,
         out_ref, resout_ref) = refs
    else:
        (x_ref, ln_in_ref, ln_post_ref, wq_ref, wk_ref, wv_ref,
         cos_ref, sin_ref, wo_ref, wg_ref, wu_ref, wd_ref,
         out_ref, resout_ref) = refs
        res_ref = None

    f32 = jnp.float32
    mm = lambda t: t.astype(matmul_dtype)      # MXU-input cast (identity in f32 mode)

    x = x_ref[...].astype(f32)
    if has_residual:
        s1 = x + res_ref[...].astype(f32)      # fused residual add (vLLM RMSNorm(x, res))
    else:
        s1 = x                                 # no zeros DMA on the first-layer path

    # ---- input RMSNorm (f32 math) ----
    var1 = jnp.mean(s1 * s1, axis=-1, keepdims=True)
    h = s1 * jax.lax.rsqrt(var1 + eps) * ln_in_ref[...].astype(f32)

    # ---- qkv projection (attention scale already folded into w_q host-side) ----
    hm = mm(h)
    q = jnp.dot(hm, wq_ref[...], preferred_element_type=f32)    # [S, H*D]
    k = jnp.dot(hm, wk_ref[...], preferred_element_type=f32)    # [S, KV*D]
    v = jnp.dot(hm, wv_ref[...], preferred_element_type=f32)    # [S, KV*D]

    n = x.shape[0]
    group = num_heads // num_kv_heads
    half = head_dim // 2

    # ---- head-major views via static lane slices (no risky lane-split reshape) ----
    qh = jnp.stack([q[:, hh * head_dim:(hh + 1) * head_dim]
                    for hh in range(num_heads)], axis=0)                 # [H, S, D]
    k_kv = jnp.stack([k[:, g * head_dim:(g + 1) * head_dim]
                      for g in range(num_kv_heads)], axis=0)             # [KV, S, D]

    # ---- neox RoPE: per-head-dim lane roll + sign-folded sin table ----
    cos = cos_ref[...].astype(f32)[None, :, :]                           # [1, S, D]
    sin = sin_ref[...].astype(f32)[None, :, :]                           # [1, S, D] (signed)

    def roll_half(t):
        # TODO(synk): at production head_dim (>=128) use pltpu.roll(t, half, axis=-1).
        return jnp.concatenate([t[..., half:], t[..., :half]], axis=-1)

    qh = qh * cos + roll_half(qh) * sin
    k_kv = k_kv * cos + roll_half(k_kv) * sin                            # RoPE once per kv head

    # ---- GQA: replicate each kv head `group`x so attention is one head-batched einsum ----
    kh = jnp.stack([k_kv[hh // group] for hh in range(num_heads)], axis=0)               # [H, S, D]
    vh = jnp.stack([v[:, (hh // group) * head_dim:((hh // group) + 1) * head_dim]
                    for hh in range(num_heads)], axis=0)                                 # [H, S, D]

    # ---- causal attention, batched over heads (no explicit transpose / per-head loop) ----
    rowq = jax.lax.broadcasted_iota(jnp.int32, (n, n), 0)
    colk = jax.lax.broadcasted_iota(jnp.int32, (n, n), 1)
    causal = (rowq >= colk)[None, :, :]
    neg = jnp.float32(jnp.finfo(jnp.float32).min)

    sc = jnp.einsum('hqd,hkd->hqk', mm(qh), mm(kh),
                    preferred_element_type=f32)                          # [H, S, S]
    sc = jnp.where(causal, sc, neg)                                      # mask in f32
    m = jnp.max(sc, axis=-1, keepdims=True)
    p = jnp.exp(sc - m)
    denom = jnp.sum(p, axis=-1, keepdims=True)
    p = p * pl.reciprocal(denom, approx=True)                            # EUP slot
    ctx = jnp.einsum('hqk,hkd->hqd', mm(p), mm(vh),
                     preferred_element_type=f32)                         # [H, S, D]

    # ---- o_proj: head-batched matmul against [H, D, HIDDEN] weights + reduce over heads ----
    o_parts = jnp.einsum('hqd,hdo->hqo', mm(ctx), wo_ref[...],
                         preferred_element_type=f32)                     # [H, S, HIDDEN]
    o = jnp.sum(o_parts, axis=0)                                         # [S, HIDDEN]

    # ---- post-attention add & RMSNorm (residual stays in VMEM) ----
    s2 = o + s1
    resout_ref[...] = s2.astype(resout_ref.dtype)
    var2 = jnp.mean(s2 * s2, axis=-1, keepdims=True)
    h2 = s2 * jax.lax.rsqrt(var2 + eps) * ln_post_ref[...].astype(f32)

    # ---- MLP: silu(gate) * up -> down ----
    h2m = mm(h2)
    gate = jnp.dot(h2m, wg_ref[...], preferred_element_type=f32)         # [S, I]
    up = jnp.dot(h2m, wu_ref[...], preferred_element_type=f32)           # [S, I]
    act = gate * jax.nn.sigmoid(gate) * up
    out_ref[...] = jnp.dot(mm(act), wd_ref[...],
                           preferred_element_type=f32).astype(out_ref.dtype)


# --------------------------------- host-side helpers ---------------------------------
def rope_tables(positions):
    """neox cos / sign-folded sin tables, [S, head_dim] each.

    sin table is [-sin, +sin] so that  x*cos + roll_half(x)*sin  ==  neox RoPE.
    """
    half = HEAD_DIM // 2
    inv_freq = ROPE_THETA ** (-(jnp.arange(half, dtype=jnp.float32) * 2.0) / HEAD_DIM)
    freqs = positions.astype(jnp.float32)[:, None] * inv_freq[None, :]   # [S, half]
    cos = jnp.cos(freqs)
    sin = jnp.sin(freqs)
    return (jnp.concatenate([cos, cos], axis=-1),
            jnp.concatenate([-sin, sin], axis=-1))


# ------------------------------ module-level forward ---------------------------------
def hat_transformer_layer(positions, hidden_states, residual, params, *,
                          matmul_dtype=jnp.float32):
    s_len, hidden = hidden_states.shape
    cos, sin_signed = rope_tables(positions)

    # Weights: cast to the MXU-input dtype host-side (halves weight DMA bytes in bf16 mode),
    # fold the attention scale into w_q, reshape w_o to head-major [H, D, HIDDEN].
    w_q = (params["w_q"] * SCALE).astype(matmul_dtype)
    w_k = params["w_k"].astype(matmul_dtype)
    w_v = params["w_v"].astype(matmul_dtype)
    w_o = params["w_o"].reshape(NUM_HEADS, HEAD_DIM, hidden).astype(matmul_dtype)
    w_g = params["w_gate"].astype(matmul_dtype)
    w_u = params["w_up"].astype(matmul_dtype)
    w_d = params["w_down"].astype(matmul_dtype)

    has_residual = residual is not None
    kernel = functools.partial(
        _hat_layer_kernel, has_residual=has_residual, eps=RMS_EPS,
        num_heads=NUM_HEADS, num_kv_heads=NUM_KV_HEADS, head_dim=HEAD_DIM,
        matmul_dtype=matmul_dtype)

    args = [hidden_states]
    if has_residual:
        args.append(residual)
    args += [params["input_ln"], params["post_ln"], w_q, w_k, w_v,
             cos, sin_signed, w_o, w_g, w_u, w_d]

    out, new_residual = pl.pallas_call(
        kernel,
        out_shape=(jax.ShapeDtypeStruct((s_len, hidden), hidden_states.dtype),
                   jax.ShapeDtypeStruct((s_len, hidden), hidden_states.dtype)),
        compiler_params=pltpu.CompilerParams(vmem_limit_bytes=32 * 1024 * 1024),
    )(*args)
    return out, new_residual


# ------------------------------ pure-JAX reference -----------------------------------
def hat_transformer_layer_ref(positions, hidden_states, residual, params):
    x = hidden_states.astype(jnp.float32)
    s_len = x.shape[0]
    s1 = x if residual is None else x + residual.astype(jnp.float32)
    h = s1 * jax.lax.rsqrt(jnp.mean(s1 * s1, -1, keepdims=True) + RMS_EPS) * params["input_ln"][0]
    q = h @ params["w_q"]
    k = h @ params["w_k"]
    v = h @ params["w_v"]

    half = HEAD_DIM // 2
    inv_freq = ROPE_THETA ** (-(jnp.arange(half, dtype=jnp.float32) * 2.0) / HEAD_DIM)
    freqs = positions.astype(jnp.float32)[:, None] * inv_freq[None, :]
    cos = jnp.concatenate([jnp.cos(freqs)] * 2, -1)
    sin = jnp.concatenate([jnp.sin(freqs)] * 2, -1)

    def rope(t, n_heads):
        t3 = t.reshape(s_len, n_heads, HEAD_DIM)
        t1, t2 = t3[..., :half], t3[..., half:]
        rot = jnp.concatenate([-t2, t1], axis=-1)
        return (t3 * cos[:, None, :] + rot * sin[:, None, :]).reshape(s_len, n_heads * HEAD_DIM)

    q = rope(q, NUM_HEADS)
    k = rope(k, NUM_KV_HEADS)
    group = NUM_HEADS // NUM_KV_HEADS
    mask = jnp.tril(jnp.ones((s_len, s_len), bool))
    outs = []
    for hq in range(NUM_HEADS):
        g = hq // group
        qh = q[:, hq * HEAD_DIM:(hq + 1) * HEAD_DIM]
        kh = k[:, g * HEAD_DIM:(g + 1) * HEAD_DIM]
        vh = v[:, g * HEAD_DIM:(g + 1) * HEAD_DIM]
        sc = (qh @ kh.T) * SCALE
        sc = jnp.where(mask, sc, -jnp.inf)
        outs.append(jax.nn.softmax(sc, axis=-1) @ vh)
    attn = jnp.concatenate(outs, axis=-1)
    o = attn @ params["w_o"]
    s2 = o + s1
    h2 = s2 * jax.lax.rsqrt(jnp.mean(s2 * s2, -1, keepdims=True) + RMS_EPS) * params["post_ln"][0]
    gate = h2 @ params["w_gate"]
    up = h2 @ params["w_up"]
    out = (gate * jax.nn.sigmoid(gate) * up) @ params["w_down"]
    return out, s2


def init_params(key):
    ks = jax.random.split(key, 7)
    scale = 0.02
    return {
        "input_ln": jnp.ones((1, HIDDEN), jnp.float32),
        "post_ln": jnp.ones((1, HIDDEN), jnp.float32),
        "w_q": scale * jax.random.normal(ks[0], (HIDDEN, Q_SIZE), jnp.float32),
        "w_k": scale * jax.random.normal(ks[1], (HIDDEN, KV_SIZE), jnp.float32),
        "w_v": scale * jax.random.normal(ks[2], (HIDDEN, KV_SIZE), jnp.float32),
        "w_o": scale * jax.random.normal(ks[3], (Q_SIZE, HIDDEN), jnp.float32),
        "w_gate": scale * jax.random.normal(ks[4], (HIDDEN, INTERMEDIATE), jnp.float32),
        "w_up": scale * jax.random.normal(ks[5], (HIDDEN, INTERMEDIATE), jnp.float32),
        "w_down": scale * jax.random.normal(ks[6], (INTERMEDIATE, HIDDEN), jnp.float32),
    }


if __name__ == "__main__":
    root = jax.random.PRNGKey(0)
    k_param, k_x, k_res = jax.random.split(root, 3)
    params = init_params(k_param)

    positions = jnp.arange(S, dtype=jnp.int32)
    hidden_states = jax.random.normal(k_x, (S, HIDDEN), jnp.float32)

    # path 1: residual=None (first-layer call path, no zeros-residual DMA)
    out, res = hat_transformer_layer(positions, hidden_states, None, params)
    out = jax.block_until_ready(out)
    res = jax.block_until_ready(res)
    ref_out, ref_res = hat_transformer_layer_ref(positions, hidden_states, None, params)
    assert out.shape == (S, HIDDEN) and res.shape == (S, HIDDEN)
    assert bool(jnp.all(jnp.isfinite(out))) and bool(jnp.all(jnp.isfinite(res)))
    assert bool(jnp.allclose(out, ref_out, rtol=1e-2, atol=1e-3))
    assert bool(jnp.allclose(res, ref_res, rtol=1e-2, atol=1e-3))

    # path 2: residual provided (deeper-layer call path, fused add inside the kernel)
    residual = 0.5 * jax.random.normal(k_res, (S, HIDDEN), jnp.float32)
    out2, res2 = hat_transformer_layer(positions, hidden_states, residual, params)
    out2 = jax.block_until_ready(out2)
    ref_out2, ref_res2 = hat_transformer_layer_ref(positions, hidden_states, residual, params)
    assert bool(jnp.allclose(out2, ref_out2, rtol=1e-2, atol=1e-3))
    assert bool(jnp.allclose(res2, ref_res2, rtol=1e-2, atol=1e-3))

    # path 3: bf16 MXU inputs (v6e/v7x fast path), f32 accumulation / norm / softmax math
    out3, res3 = hat_transformer_layer(positions, hidden_states, None, params,
                                       matmul_dtype=jnp.bfloat16)
    out3 = jax.block_until_ready(out3)
    assert bool(jnp.all(jnp.isfinite(out3))) and bool(jnp.all(jnp.isfinite(res3)))
    assert bool(jnp.allclose(out3, ref_out, rtol=5e-2, atol=5e-3))
    assert bool(jnp.allclose(res3, ref_res, rtol=5e-2, atol=5e-3))

    print("KERNEL_OK")
</pallas_src>

<mosaic_0001>
module attributes {stable_mosaic.version = 11 : i64} {
  func.func @_hat_layer_kernel(%arg0: memref<8x32xf32, #tpu.memory_space<vmem>>, %arg1: memref<1x32xf32, #tpu.memory_space<vmem>>, %arg2: memref<1x32xf32, #tpu.memory_space<vmem>>, %arg3: memref<32x32xf32, #tpu.memory_space<vmem>>, %arg4: memref<32x16xf32, #tpu.memory_space<vmem>>, %arg5: memref<32x16xf32, #tpu.memory_space<vmem>>, %arg6: memref<8x8xf32, #tpu.memory_space<vmem>>, %arg7: memref<8x8xf32, #tpu.memory_space<vmem>>, %arg8: memref<4x8x32xf32, #tpu.memory_space<vmem>>, %arg9: memref<32x64xf32, #tpu.memory_space<vmem>>, %arg10: memref<32x64xf32, #tpu.memory_space<vmem>>, %arg11: memref<64x32xf32, #tpu.memory_space<vmem>>, %arg12: memref<8x32xf32, #tpu.memory_space<vmem>>, %arg13: memref<8x32xf32, #tpu.memory_space<vmem>>) attributes {dimension_semantics = [], scalar_prefetch = 0 : i64, scratch_operands = 0 : i64, tpu.core_type = #tpu.core_type<tc>} {
    %c0 = arith.constant 0 : index
    %c0_0 = arith.constant 0 : index
    %0 = vector.load %arg0[%c0, %c0_0] : memref<8x32xf32, #tpu.memory_space<vmem>>, vector<8x32xf32>
    %1 = arith.mulf %0, %0 : vector<8x32xf32>
    %cst = arith.constant dense<0.000000e+00> : vector<8xf32>
    %2 = vector.multi_reduction <add>, %1, %cst [1] : vector<8x32xf32> to vector<8xf32>
    %3 = vector.shape_cast %2 : vector<8xf32> to vector<8x1xf32>
    %cst_1 = arith.constant 3.200000e+01 : f32
    %4 = vector.broadcast %cst_1 : f32 to vector<8x1xf32>
    %5 = arith.divf %3, %4 : vector<8x1xf32>
    %cst_2 = arith.constant 9.99999997E-7 : f32
    %6 = vector.broadcast %cst_2 : f32 to vector<8x1xf32>
    %7 = arith.addf %5, %6 : vector<8x1xf32>
    %8 = math.rsqrt %7 : vector<8x1xf32>
    %9 = vector.broadcast %8 : vector<8x1xf32> to vector<8x32xf32>
    %10 = arith.mulf %0, %9 : vector<8x32xf32>
    %c0_3 = arith.constant 0 : index
    %c0_4 = arith.constant 0 : index
    %11 = vector.load %arg1[%c0_3, %c0_4] : memref<1x32xf32, #tpu.memory_space<vmem>>, vector<1x32xf32>
    %12 = vector.broadcast %11 : vector<1x32xf32> to vector<8x32xf32>
    %13 = arith.mulf %10, %12 : vector<8x32xf32>
    %c0_5 = arith.constant 0 : index
    %c0_6 = arith.constant 0 : index
    %14 = vector.load %arg3[%c0_5, %c0_6] : memref<32x32xf32, #tpu.memory_space<vmem>>, vector<32x32xf32>
    %cst_7 = arith.constant dense<0.000000e+00> : vector<8x32xf32>
    %15 = tpu.matmul %13, %14, %cst_7 {dimension_numbers = #tpu.dot_dimension_numbers<[1], [0], [0], [1], [0, 0, 1, 1], [], []>} : vector<8x32xf32>, vector<32x32xf32>, vector<8x32xf32> -> vector<8x32xf32>
    %c0_8 = arith.constant 0 : index
    %c0_9 = arith.constant 0 : index
    %16 = vector.load %arg4[%c0_8, %c0_9] : memref<32x16xf32, #tpu.memory_space<vmem>>, vector<32x16xf32>
    %cst_10 = arith.constant dense<0.000000e+00> : vector<8x16xf32>
    %17 = tpu.matmul %13, %16, %cst_10 {dimension_numbers = #tpu.dot_dimension_numbers<[1], [0], [0], [1], [0, 0, 1, 1], [], []>} : vector<8x32xf32>, vector<32x16xf32>, vector<8x16xf32> -> vector<8x16xf32>
    %c0_11 = arith.constant 0 : index
    %c0_12 = arith.constant 0 : index
    %18 = vector.load %arg5[%c0_11, %c0_12] : memref<32x16xf32, #tpu.memory_space<vmem>>, vector<32x16xf32>
    %cst_13 = arith.constant dense<0.000000e+00> : vector<8x16xf32>
    %19 = tpu.matmul %13, %18, %cst_13 {dimension_numbers = #tpu.dot_dimension_numbers<[1], [0], [0], [1], [0, 0, 1, 1], [], []>} : vector<8x32xf32>, vector<32x16xf32>, vector<8x16xf32> -> vector<8x16xf32>
    %20 = vector.extract_strided_slice %15 {offsets = [0, 0], sizes = [8, 8], strides = [1, 1]} : vector<8x32xf32> to vector<8x8xf32>
    %21 = vector.extract_strided_slice %15 {offsets = [0, 8], sizes = [8, 8], strides = [1, 1]} : vector<8x32xf32> to vector<8x8xf32>
    %22 = vector.extract_strided_slice %15 {offsets = [0, 16], sizes = [8, 8], strides = [1, 1]} : vector<8x32xf32> to vector<8x8xf32>
    %23 = vector.extract_strided_slice %15 {offsets = [0, 24], sizes = [8, 8], strides = [1, 1]} : vector<8x32xf32> to vector<8x8xf32>
    %24 = vector.shape_cast %20 : vector<8x8xf32> to vector<1x8x8xf32>
    %25 = vector.shape_cast %21 : vector<8x8xf32> to vector<1x8x8xf32>
    %26 = vector.shape_cast %22 : vector<8x8xf32> to vector<1x8x8xf32>
    %27 = vector.shape_cast %23 : vector<8x8xf32> to vector<1x8x8xf32>
    %28 = tpu.concatenate %24, %25, %26, %27 in 0 : vector<1x8x8xf32>, vector<1x8x8xf32>, vector<1x8x8xf32>, vector<1x8x8xf32> -> vector<4x8x8xf32>
    %29 = vector.extract_strided_slice %17 {offsets = [0, 0], sizes = [8, 8], strides = [1, 1]} : vector<8x16xf32> to vector<8x8xf32>
    %30 = vector.extract_strided_slice %17 {offsets = [0, 8], sizes = [8, 8], strides = [1, 1]} : vector<8x16xf32> to vector<8x8xf32>
    %31 = vector.shape_cast %29 : vector<8x8xf32> to vector<1x8x8xf32>
    %32 = vector.shape_cast %30 : vector<8x8xf32> to vector<1x8x8xf32>
    %33 = tpu.concatenate %31, %32 in 0 : vector<1x8x8xf32>, vector<1x8x8xf32> -> vector<2x8x8xf32>
    %c0_14 = arith.constant 0 : index
    %c0_15 = arith.constant 0 : index
    %34 = vector.load %arg6[%c0_14, %c0_15] : memref<8x8xf32, #tpu.memory_space<vmem>>, vector<8x8xf32>
    %35 = vector.shape_cast %34 : vector<8x8xf32> to vector<1x8x8xf32>
    %c0_16 = arith.constant 0 : index
    %c0_17 = arith.constant 0 : index
    %36 = vector.load %arg7[%c0_16, %c0_17] : memref<8x8xf32, #tpu.memory_space<vmem>>, vector<8x8xf32>
    %37 = vector.shape_cast %36 : vector<8x8xf32> to vector<1x8x8xf32>
    %38 = vector.broadcast %35 : vector<1x8x8xf32> to vector<4x8x8xf32>
    %39 = arith.mulf %28, %38 : vector<4x8x8xf32>
    %40 = vector.extract_strided_slice %28 {offsets = [0, 0, 4], sizes = [4, 8, 4], strides = [1, 1, 1]} : vector<4x8x8xf32> to vector<4x8x4xf32>
    %41 = vector.extract_strided_slice %28 {offsets = [0, 0, 0], sizes = [4, 8, 4], strides = [1, 1, 1]} : vector<4x8x8xf32> to vector<4x8x4xf32>
    %42 = tpu.concatenate %40, %41 in 2 : vector<4x8x4xf32>, vector<4x8x4xf32> -> vector<4x8x8xf32>
    %43 = vector.broadcast %37 : vector<1x8x8xf32> to vector<4x8x8xf32>
    %44 = arith.mulf %42, %43 : vector<4x8x8xf32>
    %45 = arith.addf %39, %44 : vector<4x8x8xf32>
    %46 = vector.broadcast %35 : vector<1x8x8xf32> to vector<2x8x8xf32>
    %47 = arith.mulf %33, %46 : vector<2x8x8xf32>
    %48 = vector.extract_strided_slice %33 {offsets = [0, 0, 4], sizes = [2, 8, 4], strides = [1, 1, 1]} : vector<2x8x8xf32> to vector<2x8x4xf32>
    %49 = vector.extract_strided_slice %33 {offsets = [0, 0, 0], sizes = [2, 8, 4], strides = [1, 1, 1]} : vector<2x8x8xf32> to vector<2x8x4xf32>
    %50 = tpu.concatenate %48, %49 in 2 : vector<2x8x4xf32>, vector<2x8x4xf32> -> vector<2x8x8xf32>
    %51 = vector.broadcast %37 : vector<1x8x8xf32> to vector<2x8x8xf32>
    %52 = arith.mulf %50, %51 : vector<2x8x8xf32>
    %53 = arith.addf %47, %52 : vector<2x8x8xf32>
    %54 = vector.extract_strided_slice %53 {offsets = [0, 0, 0], sizes = [1, 8, 8], strides = [1, 1, 1]} : vector<2x8x8xf32> to vector<1x8x8xf32>
    %55 = vector.shape_cast %54 : vector<1x8x8xf32> to vector<8x8xf32>
    %56 = vector.extract_strided_slice %53 {offsets = [0, 0, 0], sizes = [1, 8, 8], strides = [1, 1, 1]} : vector<2x8x8xf32> to vector<1x8x8xf32>
    %57 = vector.shape_cast %56 : vector<1x8x8xf32> to vector<8x8xf32>
    %58 = vector.extract_strided_slice %53 {offsets = [1, 0, 0], sizes = [1, 8, 8], strides = [1, 1, 1]} : vector<2x8x8xf32> to vector<1x8x8xf32>
    %59 = vector.shape_cast %58 : vector<1x8x8xf32> to vector<8x8xf32>
    %60 = vector.extract_strided_slice %53 {offsets = [1, 0, 0], sizes = [1, 8, 8], strides = [1, 1, 1]} : vector<2x8x8xf32> to vector<1x8x8xf32>
    %61 = vector.shape_cast %60 : vector<1x8x8xf32> to vector<8x8xf32>
    %62 = vector.shape_cast %55 : vector<8x8xf32> to vector<1x8x8xf32>
    %63 = vector.shape_cast %57 : vector<8x8xf32> to vector<1x8x8xf32>
    %64 = vector.shape_cast %59 : vector<8x8xf32> to vector<1x8x8xf32>
    %65 = vector.shape_cast %61 : vector<8x8xf32> to vector<1x8x8xf32>
    %66 = tpu.concatenate %62, %63, %64, %65 in 0 : vector<1x8x8xf32>, vector<1x8x8xf32>, vector<1x8x8xf32>, vector<1x8x8xf32> -> vector<4x8x8xf32>
    %67 = vector.extract_strided_slice %19 {offsets = [0, 0], sizes = [8, 8], strides = [1, 1]} : vector<8x16xf32> to vector<8x8xf32>
    %68 = vector.extract_strided_slice %19 {offsets = [0, 0], sizes = [8, 8], strides = [1, 1]} : vector<8x16xf32> to vector<8x8xf32>
    %69 = vector.extract_strided_slice %19 {offsets = [0, 8], sizes = [8, 8], strides = [1, 1]} : vector<8x16xf32> to vector<8x8xf32>
    %70 = vector.extract_strided_slice %19 {offsets = [0, 8], sizes = [8, 8], strides = [1, 1]} : vector<8x16xf32> to vector<8x8xf32>
    %71 = vector.shape_cast %67 : vector<8x8xf32> to vector<1x8x8xf32>
    %72 = vector.shape_cast %68 : vector<8x8xf32> to vector<1x8x8xf32>
    %73 = vector.shape_cast %69 : vector<8x8xf32> to vector<1x8x8xf32>
    %74 = vector.shape_cast %70 : vector<8x8xf32> to vector<1x8x8xf32>
    %75 = tpu.concatenate %71, %72, %73, %74 in 0 : vector<1x8x8xf32>, vector<1x8x8xf32>, vector<1x8x8xf32>, vector<1x8x8xf32> -> vector<4x8x8xf32>
    %76 = tpu.iota {dimensions = array<i32: 0>} : vector<8x8xi32>
    %77 = tpu.iota {dimensions = array<i32: 1>} : vector<8x8xi32>
    %78 = arith.cmpi sge, %76, %77 : vector<8x8xi32>
    %79 = vector.shape_cast %78 : vector<8x8xi1> to vector<1x8x8xi1>
    "tpu.trace_start"() <{level = 10 : i32, message = "hqd,hkd->hqk"}> : () -> ()
    %cst_18 = arith.constant dense<0.000000e+00> : vector<4x8x8xf32>
    %80 = tpu.matmul %45, %66, %cst_18 {dimension_numbers = #tpu.dot_dimension_numbers<[2], [2], [1], [1], [0, 0, 0, 1, 1, 1], [0], [0]>} : vector<4x8x8xf32>, vector<4x8x8xf32>, vector<4x8x8xf32> -> vector<4x8x8xf32>
    %cst_19 = arith.constant -3.40282347E+38 : f32
    "tpu.trace_stop"() : () -> ()
    %81 = vector.shape_cast %79 : vector<1x8x8xi1> to vector<1x8x8xi1>
    %82 = vector.broadcast %81 : vector<1x8x8xi1> to vector<4x8x8xi1>
    %83 = vector.broadcast %cst_19 : f32 to vector<4x8x8xf32>
    %84 = arith.select %82, %80, %83 : vector<4x8x8xi1>, vector<4x8x8xf32>
    %cst_20 = arith.constant dense<0xFF800000> : vector<4x8xf32>
    %85 = vector.multi_reduction <maximumf>, %84, %cst_20 [2] : vector<4x8x8xf32> to vector<4x8xf32>
    %86 = vector.shape_cast %85 : vector<4x8xf32> to vector<4x8x1xf32>
    %87 = vector.broadcast %86 : vector<4x8x1xf32> to vector<4x8x8xf32>
    %88 = arith.subf %84, %87 : vector<4x8x8xf32>
    %89 = math.exp %88 : vector<4x8x8xf32>
    %cst_21 = arith.constant dense<0.000000e+00> : vector<4x8xf32>
    %90 = vector.multi_reduction <add>, %89, %cst_21 [2] : vector<4x8x8xf32> to vector<4x8xf32>
    %91 = vector.shape_cast %90 : vector<4x8xf32> to vector<4x8x1xf32>
    %92 = tpu.reciprocal %91 {approx = true} : vector<4x8x1xf32> -> vector<4x8x1xf32>
    %93 = vector.broadcast %92 : vector<4x8x1xf32> to vector<4x8x8xf32>
    %94 = arith.mulf %89, %93 : vector<4x8x8xf32>
    "tpu.trace_start"() <{level = 10 : i32, message = "hqk,hkd->hqd"}> : () -> ()
    %cst_22 = arith.constant dense<0.000000e+00> : vector<4x8x8xf32>
    %95 = tpu.matmul %94, %75, %cst_22 {dimension_numbers = #tpu.dot_dimension_numbers<[2], [1], [1], [2], [0, 0, 0, 1, 1, 2], [0], [0]>} : vector<4x8x8xf32>, vector<4x8x8xf32>, vector<4x8x8xf32> -> vector<4x8x8xf32>
    "tpu.trace_stop"() : () -> ()
    %c0_23 = arith.constant 0 : index
    %c0_24 = arith.constant 0 : index
    %c0_25 = arith.constant 0 : index
    %96 = vector.load %arg8[%c0_23, %c0_24, %c0_25] : memref<4x8x32xf32, #tpu.memory_space<vmem>>, vector<4x8x32xf32>
    "tpu.trace_start"() <{level = 10 : i32, message = "hqd,hdo->hqo"}> : () -> ()
    %cst_26 = arith.constant dense<0.000000e+00> : vector<4x8x32xf32>
    %97 = tpu.matmul %95, %96, %cst_26 {dimension_numbers = #tpu.dot_dimension_numbers<[2], [1], [1], [2], [0, 0, 0, 1, 1, 2], [0], [0]>} : vector<4x8x8xf32>, vector<4x8x32xf32>, vector<4x8x32xf32> -> vector<4x8x32xf32>
    "tpu.trace_stop"() : () -> ()
    %cst_27 = arith.constant dense<0.000000e+00> : vector<8x32xf32>
    %98 = vector.multi_reduction <add>, %97, %cst_27 [0] : vector<4x8x32xf32> to vector<8x32xf32>
    %99 = arith.addf %98, %0 : vector<8x32xf32>
    %c0_28 = arith.constant 0 : index
    %c0_29 = arith.constant 0 : index
    %100 = vector.load %arg13[%c0_28, %c0_29] : memref<8x32xf32, #tpu.memory_space<vmem>>, vector<8x32xf32>
    tpu.vector_store %arg13[%c0_28, %c0_29], %99 {strides = array<i32>} : memref<8x32xf32, #tpu.memory_space<vmem>>, vector<8x32xf32>,
    %101 = arith.mulf %99, %99 : vector<8x32xf32>
    %cst_30 = arith.constant dense<0.000000e+00> : vector<8xf32>
    %102 = vector.multi_reduction <add>, %101, %cst_30 [1] : vector<8x32xf32> to vector<8xf32>
    %103 = vector.shape_cast %102 : vector<8xf32> to vector<8x1xf32>
    %cst_31 = arith.constant 3.200000e+01 : f32
    %104 = vector.broadcast %cst_31 : f32 to vector<8x1xf32>
    %105 = arith.divf %103, %104 : vector<8x1xf32>
    %cst_32 = arith.constant 9.99999997E-7 : f32
    %106 = vector.broadcast %cst_32 : f32 to vector<8x1xf32>
    %107 = arith.addf %105, %106 : vector<8x1xf32>
    %108 = math.rsqrt %107 : vector<8x1xf32>
    %109 = vector.broadcast %108 : vector<8x1xf32> to vector<8x32xf32>
    %110 = arith.mulf %99, %109 : vector<8x32xf32>
    %c0_33 = arith.constant 0 : index
    %c0_34 = arith.constant 0 : index
    %111 = vector.load %arg2[%c0_33, %c0_34] : memref<1x32xf32, #tpu.memory_space<vmem>>, vector<1x32xf32>
    %112 = vector.broadcast %111 : vector<1x32xf32> to vector<8x32xf32>
    %113 = arith.mulf %110, %112 : vector<8x32xf32>
    %c0_35 = arith.constant 0 : index
    %c0_36 = arith.constant 0 : index
    %114 = vector.load %arg9[%c0_35, %c0_36] : memref<32x64xf32, #tpu.memory_space<vmem>>, vector<32x64xf32>
    %cst_37 = arith.constant dense<0.000000e+00> : vector<8x64xf32>
    %115 = tpu.matmul %113, %114, %cst_37 {dimension_numbers = #tpu.dot_dimension_numbers<[1], [0], [0], [1], [0, 0, 1, 1], [], []>} : vector<8x32xf32>, vector<32x64xf32>, vector<8x64xf32> -> vector<8x64xf32>
    %c0_38 = arith.constant 0 : index
    %c0_39 = arith.constant 0 : index
    %116 = vector.load %arg10[%c0_38, %c0_39] : memref<32x64xf32, #tpu.memory_space<vmem>>, vector<32x64xf32>
    %cst_40 = arith.constant dense<0.000000e+00> : vector<8x64xf32>
    %117 = tpu.matmul %113, %116, %cst_40 {dimension_numbers = #tpu.dot_dimension_numbers<[1], [0], [0], [1], [0, 0, 1, 1], [], []>} : vector<8x32xf32>, vector<32x64xf32>, vector<8x64xf32> -> vector<8x64xf32>
    %118 = arith.negf %115 : vector<8x64xf32>
    %119 = math.exp %118 : vector<8x64xf32>
    %cst_41 = arith.constant 1.000000e+00 : f32
    %120 = vector.broadcast %cst_41 : f32 to vector<8x64xf32>
    %121 = arith.addf %120, %119 : vector<8x64xf32>
    %122 = arith.divf %120, %121 : vector<8x64xf32>
    %123 = arith.mulf %115, %122 : vector<8x64xf32>
    %124 = arith.mulf %123, %117 : vector<8x64xf32>
    %c0_42 = arith.constant 0 : index
    %c0_43 = arith.constant 0 : index
    %125 = vector.load %arg11[%c0_42, %c0_43] : memref<64x32xf32, #tpu.memory_space<vmem>>, vector<64x32xf32>
    %cst_44 = arith.constant dense<0.000000e+00> : vector<8x32xf32>
    %126 = tpu.matmul %124, %125, %cst_44 {dimension_numbers = #tpu.dot_dimension_numbers<[1], [0], [0], [1], [0, 0, 1, 1], [], []>} : vector<8x64xf32>, vector<64x32xf32>, vector<8x32xf32> -> vector<8x32xf32>
    %c0_45 = arith.constant 0 : index
    %c0_46 = arith.constant 0 : index
    %127 = vector.load %arg12[%c0_45, %c0_46] : memref<8x32xf32, #tpu.memory_space<vmem>>, vector<8x32xf32>
    tpu.vector_store %arg12[%c0_45, %c0_46], %126 {strides = array<i32>} : memref<8x32xf32, #tpu.memory_space<vmem>>, vector<8x32xf32>,
    return
  }
}

</mosaic_0001>

<llo_original>
// kernel: tpu_custom_call.1
$region0: #{tpu_custom_call.1}
  #allocation0 [shape = 'u32[]', space=smem, size = 0x4, offset = 0x4, fixed_abs, tag = 'smem constant byte address 0x4 - core index']
  #allocation1 [shape = 'u32[144,128]{1,0:T(1,128)}', space=vmem, size = 0x12000, scoped, tag = 'internal scratch']
  %s0 = inlined_call_operand.vmem [shape: f32[8,32], index: 0, kind: input, shape index: {}]
  %s1 = inlined_call_operand.vmem [shape: f32[1,32], index: 1, kind: input, shape index: {}]
  %s2 = inlined_call_operand.vmem [shape: f32[1,32], index: 2, kind: input, shape index: {}]
  %s3 = inlined_call_operand.vmem [shape: f32[32,32], index: 3, kind: input, shape index: {}]
  %s4 = inlined_call_operand.vmem [shape: f32[32,16], index: 4, kind: input, shape index: {}]
  %s5 = inlined_call_operand.vmem [shape: f32[32,16], index: 5, kind: input, shape index: {}]
  %s6 = inlined_call_operand.vmem [shape: f32[8,8], index: 6, kind: input, shape index: {}]
  %s7 = inlined_call_operand.vmem [shape: f32[8,8], index: 7, kind: input, shape index: {}]
  %s8 = inlined_call_operand.vmem [shape: f32[4,8,32], index: 8, kind: input, shape index: {}]
  %s9 = inlined_call_operand.vmem [shape: f32[32,64], index: 9, kind: input, shape index: {}]
  %s10 = inlined_call_operand.vmem [shape: f32[32,64], index: 10, kind: input, shape index: {}]
  %s11 = inlined_call_operand.vmem [shape: f32[64,32], index: 11, kind: input, shape index: {}]
  %s12 = inlined_call_operand.hbm [shape: f32[8,32], index: 12, kind: output, shape index: {0}]
  %s13 = inlined_call_operand.hbm [shape: f32[8,32], index: 13, kind: output, shape index: {1}]
  %14 = xla_tuple %s12, %s13
  %s15 = sld [smem:[#allocation0]]
  $region66: #{tpu_custom_call.1} parent=0
    _
  %s17 = ssub.s32 1, %s15
  %s18 = scalar_select 0, %s17, %s15
  $region1: #{tpu_custom_call.1} parent=0
    #allocation2 [shape = 'u8[4096]{0}', space=vmem, size = 0x1000, scoped, tag = 'output window, operand 0, single buffered']
    #allocation3 [shape = 's32[1]{0}', space=sflag, size = 0x4, scoped, tag = 'scoped memory for tpu_custom_call.1']
    #allocation4 [shape = 'u8[4096]{0}', space=vmem, size = 0x1000, scoped, tag = 'output window, operand 1, single buffered']
    #allocation5 [shape = 's32[1]{0}', space=sflag, size = 0x4, scoped, tag = 'scoped memory for tpu_custom_call.1']
    %19 = vsyncpa [#allocation3], 0
    %20 = vsyncpa [#allocation5], 0
    // Predicated region
    $region2: #{tpu_custom_call.1} parent=1 // pred_check
      _
    $region3: #{tpu_custom_call.1} parent=1 // pred_check_branch
      %22 = sbr.rel (0) target = $region5
    $region4: #{tpu_custom_call.1} parent=1 // pred_region
      _
    $region5: #{tpu_custom_call.1} parent=1 // pred_fallthru
      _
    // Predicated region
    $region6: #{tpu_custom_call.1} parent=1 // pred_check
      _
    $region7: #{tpu_custom_call.1} parent=1 // pred_check_branch
      %24 = sbr.rel (0) target = $region9
    $region8: #{tpu_custom_call.1} parent=1 // pred_region
      _
    $region9: #{tpu_custom_call.1} parent=1 // pred_fallthru
      _
    // Predicated region
    $region10: #{tpu_custom_call.1} parent=1 // pred_check
      _
    $region11: #{tpu_custom_call.1} parent=1 // pred_check_branch
      %26 = sbr.rel (0) target = $region13
    $region12: #{tpu_custom_call.1} parent=1 // pred_region
      _
    $region13: #{tpu_custom_call.1} parent=1 // pred_fallthru
      _
    // Predicated region
    $region14: #{tpu_custom_call.1} parent=1 // pred_check
      _
    $region15: #{tpu_custom_call.1} parent=1 // pred_check_branch
      %28 = sbr.rel (0) target = $region17
    $region16: #{tpu_custom_call.1} parent=1 // pred_region
      _
    $region17: #{tpu_custom_call.1} parent=1 // pred_fallthru
      _
    // Predicated region
    $region18: #{tpu_custom_call.1} parent=1 // pred_check
      _
    $region19: #{tpu_custom_call.1} parent=1 // pred_check_branch
      %30 = sbr.rel (0) target = $region21
    $region20: #{tpu_custom_call.1} parent=1 // pred_region
      _
    $region21: #{tpu_custom_call.1} parent=1 // pred_fallthru
      _
    // Predicated region
    $region22: #{tpu_custom_call.1} parent=1 // pred_check
      _
    $region23: #{tpu_custom_call.1} parent=1 // pred_check_branch
      %32 = sbr.rel (0) target = $region25
    $region24: #{tpu_custom_call.1} parent=1 // pred_region
      _
    $region25: #{tpu_custom_call.1} parent=1 // pred_fallthru
      _
    // Predicated region
    $region26: #{tpu_custom_call.1} parent=1 // pred_check
      _
    $region27: #{tpu_custom_call.1} parent=1 // pred_check_branch
      %34 = sbr.rel (0) target = $region29
    $region28: #{tpu_custom_call.1} parent=1 // pred_region
      _
    $region29: #{tpu_custom_call.1} parent=1 // pred_fallthru
      _
    // Predicated region
    $region30: #{tpu_custom_call.1} parent=1 // pred_check
      _
    $region31: #{tpu_custom_call.1} parent=1 // pred_check_branch
      %36 = sbr.rel (0) target = $region33
    $region32: #{tpu_custom_call.1} parent=1 // pred_region
      _
    $region33: #{tpu_custom_call.1} parent=1 // pred_fallthru
      _
    // Predicated region
    $region34: #{tpu_custom_call.1} parent=1 // pred_check
      _
    $region35: #{tpu_custom_call.1} parent=1 // pred_check_branch
      %38 = sbr.rel (0) target = $region37
    $region36: #{tpu_custom_call.1} parent=1 // pred_region
      _
    $region37: #{tpu_custom_call.1} parent=1 // pred_fallthru
      _
    // Predicated region
    $region38: #{tpu_custom_call.1} parent=1 // pred_check
      _
    $region39: #{tpu_custom_call.1} parent=1 // pred_check_branch
      %40 = sbr.rel (0) target = $region41
    $region40: #{tpu_custom_call.1} parent=1 // pred_region
      _
    $region41: #{tpu_custom_call.1} parent=1 // pred_fallthru
      _
    // Predicated region
    $region42: #{tpu_custom_call.1} parent=1 // pred_check
      _
    $region43: #{tpu_custom_call.1} parent=1 // pred_check_branch
      %42 = sbr.rel (0) target = $region45
    $region44: #{tpu_custom_call.1} parent=1 // pred_region
      _
    $region45: #{tpu_custom_call.1} parent=1 // pred_fallthru
      _
    // Predicated region
    $region46: #{tpu_custom_call.1} parent=1 // pred_check
      _
    $region47: #{tpu_custom_call.1} parent=1 // pred_check_branch
      %44 = sbr.rel (0) target = $region49
    $region48: #{tpu_custom_call.1} parent=1 // pred_region
      _
    $region49: #{tpu_custom_call.1} parent=1 // pred_fallthru
      _
    %v45 = vld [vmem:[%s0] sm:$0xff]
    %v46 = vmul.f32 %v45, %v45
    %vm47 = vcmask 261120
    %v48 = vsel %vm47, %v46, 0.0
    %49 = vadd.xlane.f32.xlu0 %v48
    %v50 = vpop.xlane.xlu0 %49
    %v51 = vrcp.pop 32.0
    %v52 = vmul.f32 %v50, %v51
    %v53 = vadd.f32 %v52, 1e-06
    %v54 = vrsqrt.pop %v53
    %v55 = vmul.f32 %v45, %v54
    %v56 = vld [vmem:[%s1] sm:$0x1]
    %v58 = vlaneseq
    %v59 = vshrl.u32 %v58, 7
    %v60 = vsub.s32 0, %v59
    %v61 = vrot.slane %v56, %v60
    %v63 = vmul.f32 %v55, %v61
    %v64 = vld [vmem:[%s3] sm:$0xff]
    %v65 = vld [vmem:[%s3 + $0x8] sm:$0xff]
    %v66 = vld [vmem:[%s3 + $0x10] sm:$0xff]
    %v67 = vld [vmem:[%s3 + $0x18] sm:$0xff]
    %v69 = vsel %vm47, %v63, 0
    %71 = vmatprep.subr.mxu0 0.0
    %72 = vmatpush1.msra.mxu0 %v64
    %73 = vmatprep.subr.mxu0 0.0
    %74 = vmatpush1.msra.mxu0 %v65
    %75 = vmatprep.subr.mxu0 0.0
    %76 = vmatpush1.msra.mxu0 %v66
    %77 = vmatprep.subr.mxu0 0.0
    %78 = vmatpush1.msra.mxu0 %v67
    %79 = vmatprep.subr.mxu0 0.0
    %80 = vmatpush1.msra.mxu0 0.0
    %81 = vmatprep.subr.mxu0 0.0
    %82 = vmatpush1.msra.mxu0 0.0
    %83 = vmatprep.subr.mxu0 0.0
    %84 = vmatpush1.msra.mxu0 0.0
    %85 = vmatprep.subr.mxu0 0.0
    %86 = vmatpush1.msra.mxu0 0.0
    %87 = vmatprep.subr.mxu0 0.0
    %88 = vmatpush1.msra.mxu0 0.0
    %89 = vmatprep.subr.mxu0 0.0
    %90 = vmatpush1.msra.mxu0 0.0
    %91 = vmatprep.subr.mxu0 0.0
    %92 = vmatpush1.msra.mxu0 0.0
    %93 = vmatprep.subr.mxu0 0.0
    %94 = vmatpush1.msra.mxu0 0.0
    %95 = vmatprep.subr.mxu0 0.0
    %96 = vmatpush1.msra.mxu0 0.0
    %97 = vmatprep.subr.mxu0 0.0
    %98 = vmatpush1.msra.mxu0 0.0
    %99 = vmatprep.subr.mxu0 0.0
    %100 = vmatpush1.msra.mxu0 0.0
    %101 = vmatprep.subr.mxu0 0.0
    %102 = vmatpush1.msra.mxu0 0.0
    %103 = vmatprep.subr.mxu0 0.0
    %104 = vmatpush1.msra.mxu0 0.0
    %105 = vmatprep.subr.mxu0 0.0
    %106 = vmatpush1.msra.mxu0 0.0
    %107 = vmatprep.subr.mxu0 0.0
    %108 = vmatpush1.msra.mxu0 0.0
    %109 = vmatprep.subr.mxu0 0.0
    %110 = vmatpush1.msra.mxu0 0.0
    %111 = vmatprep.subr.mxu0 0.0
    %112 = vmatpush1.msra.mxu0 0.0
    %113 = vmatprep.subr.mxu0 0.0
    %114 = vmatpush1.msra.mxu0 0.0
    %115 = vmatprep.subr.mxu0 0.0
    %116 = vmatpush1.msra.mxu0 0.0
    %117 = vmatprep.subr.mxu0 0.0
    %118 = vmatpush1.msra.mxu0 0.0
    %119 = vmatprep.subr.mxu0 0.0
    %120 = vmatpush1.msra.mxu0 0.0
    %121 = vmatprep.subr.mxu0 0.0
    %122 = vmatpush1.msra.mxu0 0.0
    %123 = vmatprep.subr.mxu0 0.0
    %124 = vmatpush1.msra.mxu0 0.0
    %125 = vmatprep.subr.mxu0 0.0
    %126 = vmatpush1.msra.mxu0 0.0
    %127 = vmatprep.subr.mxu0 0.0
    %128 = vmatpush1.msra.mxu0 0.0
    %129 = vmatprep.subr.mxu0 0.0
    %130 = vmatpush1.msra.mxu0 0.0
    %131 = vmatprep.subr.mxu0 0.0
    %132 = vmatpush1.msra.mxu0 0.0
    %133 = vmatprep.subr.mxu0 0.0
    %134 = vmatpush1.msra.mxu0 0.0
    %135 = vmatprep.mubr.f32.mxu0 0.0
    %136 = vmatmul.mubr.f32.gmra.mrb[0].mxu0 %v69
    %v137 = vpop.f32.mrb[0].mxu0
    %v138 = vadd.f32 0.0, %v137
    %v139 = vpop.f32.mrb[0].mxu0
    %140 = vdwg.mxu0
    %v141 = vld [vmem:[%s4] sm:$0xff]
    %v142 = vld [vmem:[%s4 + $0x8] sm:$0xff]
    %v143 = vld [vmem:[%s4 + $0x10] sm:$0xff]
    %v144 = vld [vmem:[%s4 + $0x18] sm:$0xff]
    %145 = vmatprep.subr.mxu0 0.0
    %146 = vmatpush1.msra.mxu0 %v141
    %147 = vmatprep.subr.mxu0 0.0
    %148 = vmatpush1.msra.mxu0 %v142
    %149 = vmatprep.subr.mxu0 0.0
    %150 = vmatpush1.msra.mxu0 %v143
    %151 = vmatprep.subr.mxu0 0.0
    %152 = vmatpush1.msra.mxu0 %v144
    %153 = vmatprep.subr.mxu0 0.0
    %154 = vmatpush1.msra.mxu0 0.0
    %155 = vmatprep.subr.mxu0 0.0
    %156 = vmatpush1.msra.mxu0 0.0
    %157 = vmatprep.subr.mxu0 0.0
    %158 = vmatpush1.msra.mxu0 0.0
    %159 = vmatprep.subr.mxu0 0.0
    %160 = vmatpush1.msra.mxu0 0.0
    %161 = vmatprep.subr.mxu0 0.0
    %162 = vmatpush1.msra.mxu0 0.0
    %163 = vmatprep.subr.mxu0 0.0
    %164 = vmatpush1.msra.mxu0 0.0
    %165 = vmatprep.subr.mxu0 0.0
    %166 = vmatpush1.msra.mxu0 0.0
    %167 = vmatprep.subr.mxu0 0.0
    %168 = vmatpush1.msra.mxu0 0.0
    %169 = vmatprep.subr.mxu0 0.0
    %170 = vmatpush1.msra.mxu0 0.0
    %171 = vmatprep.subr.mxu0 0.0
    %172 = vmatpush1.msra.mxu0 0.0
    %173 = vmatprep.subr.mxu0 0.0
    %174 = vmatpush1.msra.mxu0 0.0
    %175 = vmatprep.subr.mxu0 0.0
    %176 = vmatpush1.msra.mxu0 0.0
    %177 = vmatprep.subr.mxu0 0.0
    %178 = vmatpush1.msra.mxu0 0.0
    %179 = vmatprep.subr.mxu0 0.0
    %180 = vmatpush1.msra.mxu0 0.0
    %181 = vmatprep.subr.mxu0 0.0
    %182 = vmatpush1.msra.mxu0 0.0
    %183 = vmatprep.subr.mxu0 0.0
    %184 = vmatpush1.msra.mxu0 0.0
    %185 = vmatprep.subr.mxu0 0.0
    %186 = vmatpush1.msra.mxu0 0.0
    %187 = vmatprep.subr.mxu0 0.0
    %188 = vmatpush1.msra.mxu0 0.0
    %189 = vmatprep.subr.mxu0 0.0
    %190 = vmatpush1.msra.mxu0 0.0
    %191 = vmatprep.subr.mxu0 0.0
    %192 = vmatpush1.msra.mxu0 0.0
    %193 = vmatprep.subr.mxu0 0.0
    %194 = vmatpush1.msra.mxu0 0.0
    %195 = vmatprep.subr.mxu0 0.0
    %196 = vmatpush1.msra.mxu0 0.0
    %197 = vmatprep.subr.mxu0 0.0
    %198 = vmatpush1.msra.mxu0 0.0
    %199 = vmatprep.subr.mxu0 0.0
    %200 = vmatpush1.msra.mxu0 0.0
    %201 = vmatprep.subr.mxu0 0.0
    %202 = vmatpush1.msra.mxu0 0.0
    %203 = vmatprep.subr.mxu0 0.0
    %204 = vmatpush1.msra.mxu0 0.0
    %205 = vmatprep.subr.mxu0 0.0
    %206 = vmatpush1.msra.mxu0 0.0
    %207 = vmatprep.subr.mxu0 0.0
    %208 = vmatpush1.msra.mxu0 0.0
    %209 = vmatprep.mubr.f32.mxu0 0.0
    %210 = vmatmul.mubr.f32.gmra.mrb[0].mxu0 %v69
    %v211 = vpop.f32.mrb[0].mxu0
    %v212 = vadd.f32 0.0, %v211
    %v213 = vpop.f32.mrb[0].mxu0
    %214 = vdwg.mxu0
    %v215 = vld [vmem:[%s5] sm:$0xff]
    %v216 = vld [vmem:[%s5 + $0x8] sm:$0xff]
    %v217 = vld [vmem:[%s5 + $0x10] sm:$0xff]
    %v218 = vld [vmem:[%s5 + $0x18] sm:$0xff]
    %219 = vmatprep.subr.mxu0 0.0
    %220 = vmatpush1.msra.mxu0 %v215
    %221 = vmatprep.subr.mxu0 0.0
    %222 = vmatpush1.msra.mxu0 %v216
    %223 = vmatprep.subr.mxu0 0.0
    %224 = vmatpush1.msra.mxu0 %v217
    %225 = vmatprep.subr.mxu0 0.0
    %226 = vmatpush1.msra.mxu0 %v218
    %227 = vmatprep.subr.mxu0 0.0
    %228 = vmatpush1.msra.mxu0 0.0
    %229 = vmatprep.subr.mxu0 0.0
    %230 = vmatpush1.msra.mxu0 0.0
    %231 = vmatprep.subr.mxu0 0.0
    %232 = vmatpush1.msra.mxu0 0.0
    %233 = vmatprep.subr.mxu0 0.0
    %234 = vmatpush1.msra.mxu0 0.0
    %235 = vmatprep.subr.mxu0 0.0
    %236 = vmatpush1.msra.mxu0 0.0
    %237 = vmatprep.subr.mxu0 0.0
    %238 = vmatpush1.msra.mxu0 0.0
    %239 = vmatprep.subr.mxu0 0.0
    %240 = vmatpush1.msra.mxu0 0.0
    %241 = vmatprep.subr.mxu0 0.0
    %242 = vmatpush1.msra.mxu0 0.0
    %243 = vmatprep.subr.mxu0 0.0
    %244 = vmatpush1.msra.mxu0 0.0
    %245 = vmatprep.subr.mxu0 0.0
    %246 = vmatpush1.msra.mxu0 0.0
    %247 = vmatprep.subr.mxu0 0.0
    %248 = vmatpush1.msra.mxu0 0.0
    %249 = vmatprep.subr.mxu0 0.0
    %250 = vmatpush1.msra.mxu0 0.0
    %251 = vmatprep.subr.mxu0 0.0
    %252 = vmatpush1.msra.mxu0 0.0
    %253 = vmatprep.subr.mxu0 0.0
    %254 = vmatpush1.msra.mxu0 0.0
    %255 = vmatprep.subr.mxu0 0.0
    %256 = vmatpush1.msra.mxu0 0.0
    %257 = vmatprep.subr.mxu0 0.0
    %258 = vmatpush1.msra.mxu0 0.0
    %259 = vmatprep.subr.mxu0 0.0
    %260 = vmatpush1.msra.mxu0 0.0
    %261 = vmatprep.subr.mxu0 0.0
    %262 = vmatpush1.msra.mxu0 0.0
    %263 = vmatprep.subr.mxu0 0.0
    %264 = vmatpush1.msra.mxu0 0.0
    %265 = vmatprep.subr.mxu0 0.0
    %266 = vmatpush1.msra.mxu0 0.0
    %267 = vmatprep.subr.mxu0 0.0
    %268 = vmatpush1.msra.mxu0 0.0
    %269 = vmatprep.subr.mxu0 0.0
    %270 = vmatpush1.msra.mxu0 0.0
    %271 = vmatprep.subr.mxu0 0.0
    %272 = vmatpush1.msra.mxu0 0.0
    %273 = vmatprep.subr.mxu0 0.0
    %274 = vmatpush1.msra.mxu0 0.0
    %275 = vmatprep.subr.mxu0 0.0
    %276 = vmatpush1.msra.mxu0 0.0
    %277 = vmatprep.subr.mxu0 0.0
    %278 = vmatpush1.msra.mxu0 0.0
    %279 = vmatprep.subr.mxu0 0.0
    %280 = vmatpush1.msra.mxu0 0.0
    %281 = vmatprep.subr.mxu0 0.0
    %282 = vmatpush1.msra.mxu0 0.0
    %283 = vmatprep.mubr.f32.mxu0 0.0
    %284 = vmatmul.mubr.f32.gmra.mrb[0].mxu0 %v69
    %v285 = vpop.f32.mrb[0].mxu0
    %v286 = vadd.f32 0.0, %v285
    %v287 = vpop.f32.mrb[0].mxu0
    %288 = vdwg.mxu0
    %290 = vrot.lane.b32.xlu0 %v138, 120
    %v291 = vpop.permute.xlu0 %290
    %293 = vrot.lane.b32.xlu0 %v138, 112
    %v294 = vpop.permute.xlu0 %293
    %296 = vrot.lane.b32.xlu0 %v138, 104
    %v297 = vpop.permute.xlu0 %296
    %300 = vrot.lane.b32.xlu0 %v212, 120
    %v301 = vpop.permute.xlu0 %300
    %v303 = vld [vmem:[%s6] sm:$0xff]
    %v304 = vld [vmem:[%s7] sm:$0xff]
    %v305 = vmul.f32 %v138, %v303
    %v306 = vmul.f32 %v291, %v303
    %v307 = vmul.f32 %v294, %v303
    %v308 = vmul.f32 %v297, %v303
    %309 = vrot.lane.b32.xlu0 %v138, 124
    %v310 = vpop.permute.xlu0 %309
    %311 = vrot.lane.b32.xlu0 %v291, 124
    %v312 = vpop.permute.xlu0 %311
    %313 = vrot.lane.b32.xlu0 %v294, 124
    %v314 = vpop.permute.xlu0 %313
    %315 = vrot.lane.b32.xlu0 %v297, 124
    %v316 = vpop.permute.xlu0 %315
    %321 = vrot.lane.b32.xlu0 %v138, 4
    %v322 = vpop.permute.xlu0 %321
    %323 = vrot.lane.b32.xlu0 %v291, 4
    %v324 = vpop.permute.xlu0 %323
    %325 = vrot.lane.b32.xlu0 %v294, 4
    %v326 = vpop.permute.xlu0 %325
    %327 = vrot.lane.b32.xlu0 %v297, 4
    %v328 = vpop.permute.xlu0 %327
    %vm333 = vcmask 31744
    %v334 = vsel %vm333, %v310, %v322
    %v335 = vsel %vm333, %v312, %v324
    %v336 = vsel %vm333, %v314, %v326
    %v337 = vsel %vm333, %v316, %v328
    %v338 = vmul.f32 %v334, %v304
    %v339 = vmul.f32 %v335, %v304
    %v340 = vmul.f32 %v336, %v304
    %v341 = vmul.f32 %v337, %v304
    %v342 = vadd.f32 %v305, %v338
    %v343 = vadd.f32 %v306, %v339
    %v344 = vadd.f32 %v307, %v340
    %v345 = vadd.f32 %v308, %v341
    %v346 = vmul.f32 %v212, %v303
    %v347 = vmul.f32 %v301, %v303
    %348 = vrot.lane.b32.xlu0 %v212, 124
    %v349 = vpop.permute.xlu0 %348
    %350 = vrot.lane.b32.xlu0 %v301, 124
    %v351 = vpop.permute.xlu0 %350
    %354 = vrot.lane.b32.xlu0 %v212, 4
    %v355 = vpop.permute.xlu0 %354
    %356 = vrot.lane.b32.xlu0 %v301, 4
    %v357 = vpop.permute.xlu0 %356
    %v360 = vsel %vm333, %v349, %v355
    %v361 = vsel %vm333, %v351, %v357
    %v362 = vmul.f32 %v360, %v304
    %v363 = vmul.f32 %v361, %v304
    %v364 = vadd.f32 %v346, %v362
    %v365 = vadd.f32 %v347, %v363
    %367 = vrot.lane.b32.xlu0 %v286, 120
    %v368 = vpop.permute.xlu0 %367
    %v370 = vlaneseq
    %v371 = vshrl.u32 %v370, 7
    %v372 = vlaneseq
    %v373 = vand.u32 %v372, 127
    %vm374 = vcmp.ge.s32.totalorder %v371, %v373
    %vm375 = vcmask 64512
    %v377 = vsel %vm375, %v342, 0
    %v380 = vsel %vm375, %v364, 0
    %382 = vmatprep.subr.mxu0 0.0
    %383 = vmatpush1.xpose.msra.mxu0 %v380
    %384 = vmatprep.subr.mxu0 0.0
    %385 = vmatpush1.xpose.msra.mxu0 0.0
    %386 = vmatprep.subr.mxu0 0.0
    %387 = vmatpush1.xpose.msra.mxu0 0.0
    %388 = vmatprep.subr.mxu0 0.0
    %389 = vmatpush1.xpose.msra.mxu0 0.0
    %390 = vmatprep.subr.mxu0 0.0
    %391 = vmatpush1.xpose.msra.mxu0 0.0
    %392 = vmatprep.subr.mxu0 0.0
    %393 = vmatpush1.xpose.msra.mxu0 0.0
    %394 = vmatprep.subr.mxu0 0.0
    %395 = vmatpush1.xpose.msra.mxu0 0.0
    %396 = vmatprep.subr.mxu0 0.0
    %397 = vmatpush1.xpose.msra.mxu0 0.0
    %398 = vmatprep.subr.mxu0 0.0
    %399 = vmatpush1.xpose.msra.mxu0 0.0
    %400 = vmatprep.subr.mxu0 0.0
    %401 = vmatpush1.xpose.msra.mxu0 0.0
    %402 = vmatprep.subr.mxu0 0.0
    %403 = vmatpush1.xpose.msra.mxu0 0.0
    %404 = vmatprep.subr.mxu0 0.0
    %405 = vmatpush1.xpose.msra.mxu0 0.0
    %406 = vmatprep.subr.mxu0 0.0
    %407 = vmatpush1.xpose.msra.mxu0 0.0
    %408 = vmatprep.subr.mxu0 0.0
    %409 = vmatpush1.xpose.msra.mxu0 0.0
    %410 = vmatprep.subr.mxu0 0.0
    %411 = vmatpush1.xpose.msra.mxu0 0.0
    %412 = vmatprep.subr.mxu0 0.0
    %413 = vmatpush1.xpose.msra.mxu0 0.0
    %414 = vmatprep.subr.mxu0 0.0
    %415 = vmatpush1.xpose.msra.mxu0 0.0
    %416 = vmatprep.subr.mxu0 0.0
    %417 = vmatpush1.xpose.msra.mxu0 0.0
    %418 = vmatprep.subr.mxu0 0.0
    %419 = vmatpush1.xpose.msra.mxu0 0.0
    %420 = vmatprep.subr.mxu0 0.0
    %421 = vmatpush1.xpose.msra.mxu0 0.0
    %422 = vmatprep.subr.mxu0 0.0
    %423 = vmatpush1.xpose.msra.mxu0 0.0
    %424 = vmatprep.subr.mxu0 0.0
    %425 = vmatpush1.xpose.msra.mxu0 0.0
    %426 = vmatprep.subr.mxu0 0.0
    %427 = vmatpush1.xpose.msra.mxu0 0.0
    %428 = vmatprep.subr.mxu0 0.0
    %429 = vmatpush1.xpose.msra.mxu0 0.0
    %430 = vmatprep.subr.mxu0 0.0
    %431 = vmatpush1.xpose.msra.mxu0 0.0
    %432 = vmatprep.subr.mxu0 0.0
    %433 = vmatpush1.xpose.msra.mxu0 0.0
    %434 = vmatprep.subr.mxu0 0.0
    %435 = vmatpush1.xpose.msra.mxu0 0.0
    %436 = vmatprep.subr.mxu0 0.0
    %437 = vmatpush1.xpose.msra.mxu0 0.0
    %438 = vmatprep.subr.mxu0 0.0
    %439 = vmatpush1.xpose.msra.mxu0 0.0
    %440 = vmatprep.subr.mxu0 0.0
    %441 = vmatpush1.xpose.msra.mxu0 0.0
    %442 = vmatprep.subr.mxu0 0.0
    %443 = vmatpush1.xpose.msra.mxu0 0.0
    %444 = vmatprep.subr.mxu0 0.0
    %445 = vmatpush1.xpose.msra.mxu0 0.0
    %446 = vmatprep.mubr.f32.mxu0 0.0
    %447 = vmatmul.mubr.f32.gmra.mrb[0].mxu0 %v377
    %v448 = vpop.f32.mrb[0].mxu0
    %v449 = vadd.f32 0.0, %v448
    %v450 = vpop.f32.mrb[0].mxu0
    %451 = vdwg.mxu0
    %v453 = vsel %vm375, %v343, 0
    %455 = vmatprep.subr.mxu0 0.0
    %456 = vmatpush1.xpose.msra.mxu0 %v380
    %457 = vmatprep.subr.mxu0 0.0
    %458 = vmatpush1.xpose.msra.mxu0 0.0
    %459 = vmatprep.subr.mxu0 0.0
    %460 = vmatpush1.xpose.msra.mxu0 0.0
    %461 = vmatprep.subr.mxu0 0.0
    %462 = vmatpush1.xpose.msra.mxu0 0.0
    %463 = vmatprep.subr.mxu0 0.0
    %464 = vmatpush1.xpose.msra.mxu0 0.0
    %465 = vmatprep.subr.mxu0 0.0
    %466 = vmatpush1.xpose.msra.mxu0 0.0
    %467 = vmatprep.subr.mxu0 0.0
    %468 = vmatpush1.xpose.msra.mxu0 0.0
    %469 = vmatprep.subr.mxu0 0.0
    %470 = vmatpush1.xpose.msra.mxu0 0.0
    %471 = vmatprep.subr.mxu0 0.0
    %472 = vmatpush1.xpose.msra.mxu0 0.0
    %473 = vmatprep.subr.mxu0 0.0
    %474 = vmatpush1.xpose.msra.mxu0 0.0
    %475 = vmatprep.subr.mxu0 0.0
    %476 = vmatpush1.xpose.msra.mxu0 0.0
    %477 = vmatprep.subr.mxu0 0.0
    %478 = vmatpush1.xpose.msra.mxu0 0.0
    %479 = vmatprep.subr.mxu0 0.0
    %480 = vmatpush1.xpose.msra.mxu0 0.0
    %481 = vmatprep.subr.mxu0 0.0
    %482 = vmatpush1.xpose.msra.mxu0 0.0
    %483 = vmatprep.subr.mxu0 0.0
    %484 = vmatpush1.xpose.msra.mxu0 0.0
    %485 = vmatprep.subr.mxu0 0.0
    %486 = vmatpush1.xpose.msra.mxu0 0.0
    %487 = vmatprep.subr.mxu0 0.0
    %488 = vmatpush1.xpose.msra.mxu0 0.0
    %489 = vmatprep.subr.mxu0 0.0
    %490 = vmatpush1.xpose.msra.mxu0 0.0
    %491 = vmatprep.subr.mxu0 0.0
    %492 = vmatpush1.xpose.msra.mxu0 0.0
    %493 = vmatprep.subr.mxu0 0.0
    %494 = vmatpush1.xpose.msra.mxu0 0.0
    %495 = vmatprep.subr.mxu0 0.0
    %496 = vmatpush1.xpose.msra.mxu0 0.0
    %497 = vmatprep.subr.mxu0 0.0
    %498 = vmatpush1.xpose.msra.mxu0 0.0
    %499 = vmatprep.subr.mxu0 0.0
    %500 = vmatpush1.xpose.msra.mxu0 0.0
    %501 = vmatprep.subr.mxu0 0.0
    %502 = vmatpush1.xpose.msra.mxu0 0.0
    %503 = vmatprep.subr.mxu0 0.0
    %504 = vmatpush1.xpose.msra.mxu0 0.0
    %505 = vmatprep.subr.mxu0 0.0
    %506 = vmatpush1.xpose.msra.mxu0 0.0
    %507 = vmatprep.subr.mxu0 0.0
    %508 = vmatpush1.xpose.msra.mxu0 0.0
    %509 = vmatprep.subr.mxu0 0.0
    %510 = vmatpush1.xpose.msra.mxu0 0.0
    %511 = vmatprep.subr.mxu0 0.0
    %512 = vmatpush1.xpose.msra.mxu0 0.0
    %513 = vmatprep.subr.mxu0 0.0
    %514 = vmatpush1.xpose.msra.mxu0 0.0
    %515 = vmatprep.subr.mxu0 0.0
    %516 = vmatpush1.xpose.msra.mxu0 0.0
    %517 = vmatprep.subr.mxu0 0.0
    %518 = vmatpush1.xpose.msra.mxu0 0.0
    %519 = vmatprep.mubr.f32.mxu0 0.0
    %520 = vmatmul.mubr.f32.gmra.mrb[0].mxu0 %v453
    %v521 = vpop.f32.mrb[0].mxu0
    %v522 = vadd.f32 0.0, %v521
    %v523 = vpop.f32.mrb[0].mxu0
    %524 = vdwg.mxu0
    %v526 = vsel %vm375, %v344, 0
    %v529 = vsel %vm375, %v365, 0
    %531 = vmatprep.subr.mxu0 0.0
    %532 = vmatpush1.xpose.msra.mxu0 %v529
    %533 = vmatprep.subr.mxu0 0.0
    %534 = vmatpush1.xpose.msra.mxu0 0.0
    %535 = vmatprep.subr.mxu0 0.0
    %536 = vmatpush1.xpose.msra.mxu0 0.0
    %537 = vmatprep.subr.mxu0 0.0
    %538 = vmatpush1.xpose.msra.mxu0 0.0
    %539 = vmatprep.subr.mxu0 0.0
    %540 = vmatpush1.xpose.msra.mxu0 0.0
    %541 = vmatprep.subr.mxu0 0.0
    %542 = vmatpush1.xpose.msra.mxu0 0.0
    %543 = vmatprep.subr.mxu0 0.0
    %544 = vmatpush1.xpose.msra.mxu0 0.0
    %545 = vmatprep.subr.mxu0 0.0
    %546 = vmatpush1.xpose.msra.mxu0 0.0
    %547 = vmatprep.subr.mxu0 0.0
    %548 = vmatpush1.xpose.msra.mxu0 0.0
    %549 = vmatprep.subr.mxu0 0.0
    %550 = vmatpush1.xpose.msra.mxu0 0.0
    %551 = vmatprep.subr.mxu0 0.0
    %552 = vmatpush1.xpose.msra.mxu0 0.0
    %553 = vmatprep.subr.mxu0 0.0
    %554 = vmatpush1.xpose.msra.mxu0 0.0
    %555 = vmatprep.subr.mxu0 0.0
    %556 = vmatpush1.xpose.msra.mxu0 0.0
    %557 = vmatprep.subr.mxu0 0.0
    %558 = vmatpush1.xpose.msra.mxu0 0.0
    %559 = vmatprep.subr.mxu0 0.0
    %560 = vmatpush1.xpose.msra.mxu0 0.0
    %561 = vmatprep.subr.mxu0 0.0
    %562 = vmatpush1.xpose.msra.mxu0 0.0
    %563 = vmatprep.subr.mxu0 0.0
    %564 = vmatpush1.xpose.msra.mxu0 0.0
    %565 = vmatprep.subr.mxu0 0.0
    %566 = vmatpush1.xpose.msra.mxu0 0.0
    %567 = vmatprep.subr.mxu0 0.0
    %568 = vmatpush1.xpose.msra.mxu0 0.0
    %569 = vmatprep.subr.mxu0 0.0
    %570 = vmatpush1.xpose.msra.mxu0 0.0
    %571 = vmatprep.subr.mxu0 0.0
    %572 = vmatpush1.xpose.msra.mxu0 0.0
    %573 = vmatprep.subr.mxu0 0.0
    %574 = vmatpush1.xpose.msra.mxu0 0.0
    %575 = vmatprep.subr.mxu0 0.0
    %576 = vmatpush1.xpose.msra.mxu0 0.0
    %577 = vmatprep.subr.mxu0 0.0
    %578 = vmatpush1.xpose.msra.mxu0 0.0
    %579 = vmatprep.subr.mxu0 0.0
    %580 = vmatpush1.xpose.msra.mxu0 0.0
    %581 = vmatprep.subr.mxu0 0.0
    %582 = vmatpush1.xpose.msra.mxu0 0.0
    %583 = vmatprep.subr.mxu0 0.0
    %584 = vmatpush1.xpose.msra.mxu0 0.0
    %585 = vmatprep.subr.mxu0 0.0
    %586 = vmatpush1.xpose.msra.mxu0 0.0
    %587 = vmatprep.subr.mxu0 0.0
    %588 = vmatpush1.xpose.msra.mxu0 0.0
    %589 = vmatprep.subr.mxu0 0.0
    %590 = vmatpush1.xpose.msra.mxu0 0.0
    %591 = vmatprep.subr.mxu0 0.0
    %592 = vmatpush1.xpose.msra.mxu0 0.0
    %593 = vmatprep.subr.mxu0 0.0
    %594 = vmatpush1.xpose.msra.mxu0 0.0
    %595 = vmatprep.mubr.f32.mxu0 0.0
    %596 = vmatmul.mubr.f32.gmra.mrb[0].mxu0 %v526
    %v597 = vpop.f32.mrb[0].mxu0
    %v598 = vadd.f32 0.0, %v597
    %v599 = vpop.f32.mrb[0].mxu0
    %600 = vdwg.mxu0
    %v602 = vsel %vm375, %v345, 0
    %604 = vmatprep.subr.mxu0 0.0
    %605 = vmatpush1.xpose.msra.mxu0 %v529
    %606 = vmatprep.subr.mxu0 0.0
    %607 = vmatpush1.xpose.msra.mxu0 0.0
    %608 = vmatprep.subr.mxu0 0.0
    %609 = vmatpush1.xpose.msra.mxu0 0.0
    %610 = vmatprep.subr.mxu0 0.0
    %611 = vmatpush1.xpose.msra.mxu0 0.0
    %612 = vmatprep.subr.mxu0 0.0
    %613 = vmatpush1.xpose.msra.mxu0 0.0
    %614 = vmatprep.subr.mxu0 0.0
    %615 = vmatpush1.xpose.msra.mxu0 0.0
    %616 = vmatprep.subr.mxu0 0.0
    %617 = vmatpush1.xpose.msra.mxu0 0.0
    %618 = vmatprep.subr.mxu0 0.0
    %619 = vmatpush1.xpose.msra.mxu0 0.0
    %620 = vmatprep.subr.mxu0 0.0
    %621 = vmatpush1.xpose.msra.mxu0 0.0
    %622 = vmatprep.subr.mxu0 0.0
    %623 = vmatpush1.xpose.msra.mxu0 0.0
    %624 = vmatprep.subr.mxu0 0.0
    %625 = vmatpush1.xpose.msra.mxu0 0.0
    %626 = vmatprep.subr.mxu0 0.0
    %627 = vmatpush1.xpose.msra.mxu0 0.0
    %628 = vmatprep.subr.mxu0 0.0
    %629 = vmatpush1.xpose.msra.mxu0 0.0
    %630 = vmatprep.subr.mxu0 0.0
    %631 = vmatpush1.xpose.msra.mxu0 0.0
    %632 = vmatprep.subr.mxu0 0.0
    %633 = vmatpush1.xpose.msra.mxu0 0.0
    %634 = vmatprep.subr.mxu0 0.0
    %635 = vmatpush1.xpose.msra.mxu0 0.0
    %636 = vmatprep.subr.mxu0 0.0
    %637 = vmatpush1.xpose.msra.mxu0 0.0
    %638 = vmatprep.subr.mxu0 0.0
    %639 = vmatpush1.xpose.msra.mxu0 0.0
    %640 = vmatprep.subr.mxu0 0.0
    %641 = vmatpush1.xpose.msra.mxu0 0.0
    %642 = vmatprep.subr.mxu0 0.0
    %643 = vmatpush1.xpose.msra.mxu0 0.0
    %644 = vmatprep.subr.mxu0 0.0
    %645 = vmatpush1.xpose.msra.mxu0 0.0
    %646 = vmatprep.subr.mxu0 0.0
    %647 = vmatpush1.xpose.msra.mxu0 0.0
    %648 = vmatprep.subr.mxu0 0.0
    %649 = vmatpush1.xpose.msra.mxu0 0.0
    %650 = vmatprep.subr.mxu0 0.0
    %651 = vmatpush1.xpose.msra.mxu0 0.0
    %652 = vmatprep.subr.mxu0 0.0
    %653 = vmatpush1.xpose.msra.mxu0 0.0
    %654 = vmatprep.subr.mxu0 0.0
    %655 = vmatpush1.xpose.msra.mxu0 0.0
    %656 = vmatprep.subr.mxu0 0.0
    %657 = vmatpush1.xpose.msra.mxu0 0.0
    %658 = vmatprep.subr.mxu0 0.0
    %659 = vmatpush1.xpose.msra.mxu0 0.0
    %660 = vmatprep.subr.mxu0 0.0
    %661 = vmatpush1.xpose.msra.mxu0 0.0
    %662 = vmatprep.subr.mxu0 0.0
    %663 = vmatpush1.xpose.msra.mxu0 0.0
    %664 = vmatprep.subr.mxu0 0.0
    %665 = vmatpush1.xpose.msra.mxu0 0.0
    %666 = vmatprep.subr.mxu0 0.0
    %667 = vmatpush1.xpose.msra.mxu0 0.0
    %668 = vmatprep.mubr.f32.mxu0 0.0
    %669 = vmatmul.mubr.f32.gmra.mrb[0].mxu0 %v602
    %v670 = vpop.f32.mrb[0].mxu0
    %v671 = vadd.f32 0.0, %v670
    %v672 = vpop.f32.mrb[0].mxu0
    %673 = vdwg.mxu0
    %v674 = vsel %vm374, 1, 0
    %vm675 = vcmp.eq.s32.totalorder %v674, 1
    %v676 = vsel %vm675, %v449, -3.4028235e+38
    %v677 = vsel %vm675, %v522, -3.4028235e+38
    %v678 = vsel %vm675, %v598, -3.4028235e+38
    %v679 = vsel %vm675, %v671, -3.4028235e+38
    %v680 = vsel %vm375, %v676, -inf
    %681 = vmax.xlane.f32.xlu0 %v680
    %v682 = vpop.xlane.xlu0 %681
    %v683 = vsel %vm375, %v677, -inf
    %684 = vmax.xlane.f32.xlu0 %v683
    %v685 = vpop.xlane.xlu0 %684
    %v686 = vsel %vm375, %v678, -inf
    %687 = vmax.xlane.f32.xlu0 %v686
    %v688 = vpop.xlane.xlu0 %687
    %v689 = vsel %vm375, %v679, -inf
    %690 = vmax.xlane.f32.xlu0 %v689
    %v691 = vpop.xlane.xlu0 %690
    %v692 = vsub.f32 %v676, %v682
    %v693 = vsub.f32 %v677, %v685
    %v694 = vsub.f32 %v678, %v688
    %v695 = vsub.f32 %v679, %v691
    %v696 = vmul.f32 %v692, 1.442695
    %v697 = vpow.pop %v696
    %v698 = vmul.f32 %v693, 1.442695
    %v699 = vpow.pop %v698
    %v700 = vmul.f32 %v694, 1.442695
    %v701 = vpow.pop %v700
    %v702 = vmul.f32 %v695, 1.442695
    %v703 = vpow.pop %v702
    %v704 = vsel %vm375, %v697, 0.0
    %705 = vadd.xlane.f32.xlu0 %v704
    %v706 = vpop.xlane.xlu0 %705
    %v707 = vsel %vm375, %v699, 0.0
    %708 = vadd.xlane.f32.xlu0 %v707
    %v709 = vpop.xlane.xlu0 %708
    %v710 = vsel %vm375, %v701, 0.0
    %711 = vadd.xlane.f32.xlu0 %v710
    %v712 = vpop.xlane.xlu0 %711
    %v713 = vsel %vm375, %v703, 0.0
    %714 = vadd.xlane.f32.xlu0 %v713
    %v715 = vpop.xlane.xlu0 %714
    %v716 = vrcp.pop %v706
    %v717 = vrcp.pop %v709
    %v718 = vrcp.pop %v712
    %v719 = vrcp.pop %v715
    %v720 = vmul.f32 %v697, %v716
    %v721 = vmul.f32 %v699, %v717
    %v722 = vmul.f32 %v701, %v718
    %v723 = vmul.f32 %v703, %v719
    %v725 = vsel %vm375, %v720, 0
    %727 = vmatprep.subr.mxu0 0.0
    %728 = vmatpush1.msra.mxu0 %v286
    %729 = vmatprep.subr.mxu0 0.0
    %730 = vmatpush1.msra.mxu0 0.0
    %731 = vmatprep.subr.mxu0 0.0
    %732 = vmatpush1.msra.mxu0 0.0
    %733 = vmatprep.subr.mxu0 0.0
    %734 = vmatpush1.msra.mxu0 0.0
    %735 = vmatprep.subr.mxu0 0.0
    %736 = vmatpush1.msra.mxu0 0.0
    %737 = vmatprep.subr.mxu0 0.0
    %738 = vmatpush1.msra.mxu0 0.0
    %739 = vmatprep.subr.mxu0 0.0
    %740 = vmatpush1.msra.mxu0 0.0
    %741 = vmatprep.subr.mxu0 0.0
    %742 = vmatpush1.msra.mxu0 0.0
    %743 = vmatprep.subr.mxu0 0.0
    %744 = vmatpush1.msra.mxu0 0.0
    %745 = vmatprep.subr.mxu0 0.0
    %746 = vmatpush1.msra.mxu0 0.0
    %747 = vmatprep.subr.mxu0 0.0
    %748 = vmatpush1.msra.mxu0 0.0
    %749 = vmatprep.subr.mxu0 0.0
    %750 = vmatpush1.msra.mxu0 0.0
    %751 = vmatprep.subr.mxu0 0.0
    %752 = vmatpush1.msra.mxu0 0.0
    %753 = vmatprep.subr.mxu0 0.0
    %754 = vmatpush1.msra.mxu0 0.0
    %755 = vmatprep.subr.mxu0 0.0
    %756 = vmatpush1.msra.mxu0 0.0
    %757 = vmatprep.subr.mxu0 0.0
    %758 = vmatpush1.msra.mxu0 0.0
    %759 = vmatprep.subr.mxu0 0.0
    %760 = vmatpush1.msra.mxu0 0.0
    %761 = vmatprep.subr.mxu0 0.0
    %762 = vmatpush1.msra.mxu0 0.0
    %763 = vmatprep.subr.mxu0 0.0
    %764 = vmatpush1.msra.mxu0 0.0
    %765 = vmatprep.subr.mxu0 0.0
    %766 = vmatpush1.msra.mxu0 0.0
    %767 = vmatprep.subr.mxu0 0.0
    %768 = vmatpush1.msra.mxu0 0.0
    %769 = vmatprep.subr.mxu0 0.0
    %770 = vmatpush1.msra.mxu0 0.0
    %771 = vmatprep.subr.mxu0 0.0
    %772 = vmatpush1.msra.mxu0 0.0
    %773 = vmatprep.subr.mxu0 0.0
    %774 = vmatpush1.msra.mxu0 0.0
    %775 = vmatprep.subr.mxu0 0.0
    %776 = vmatpush1.msra.mxu0 0.0
    %777 = vmatprep.subr.mxu0 0.0
    %778 = vmatpush1.msra.mxu0 0.0
    %779 = vmatprep.subr.mxu0 0.0
    %780 = vmatpush1.msra.mxu0 0.0
    %781 = vmatprep.subr.mxu0 0.0
    %782 = vmatpush1.msra.mxu0 0.0
    %783 = vmatprep.subr.mxu0 0.0
    %784 = vmatpush1.msra.mxu0 0.0
    %785 = vmatprep.subr.mxu0 0.0
    %786 = vmatpush1.msra.mxu0 0.0
    %787 = vmatprep.subr.mxu0 0.0
    %788 = vmatpush1.msra.mxu0 0.0
    %789 = vmatprep.subr.mxu0 0.0
    %790 = vmatpush1.msra.mxu0 0.0
    %791 = vmatprep.mubr.f32.mxu0 0.0
    %792 = vmatmul.mubr.f32.gmra.mrb[0].mxu0 %v725
    %v793 = vpop.f32.mrb[0].mxu0
    %v794 = vadd.f32 0.0, %v793
    %v795 = vpop.f32.mrb[0].mxu0
    %796 = vdwg.mxu0
    %v798 = vsel %vm375, %v721, 0
    %800 = vmatprep.subr.mxu0 0.0
    %801 = vmatpush1.msra.mxu0 %v286
    %802 = vmatprep.subr.mxu0 0.0
    %803 = vmatpush1.msra.mxu0 0.0
    %804 = vmatprep.subr.mxu0 0.0
    %805 = vmatpush1.msra.mxu0 0.0
    %806 = vmatprep.subr.mxu0 0.0
    %807 = vmatpush1.msra.mxu0 0.0
    %808 = vmatprep.subr.mxu0 0.0
    %809 = vmatpush1.msra.mxu0 0.0
    %810 = vmatprep.subr.mxu0 0.0
    %811 = vmatpush1.msra.mxu0 0.0
    %812 = vmatprep.subr.mxu0 0.0
    %813 = vmatpush1.msra.mxu0 0.0
    %814 = vmatprep.subr.mxu0 0.0
    %815 = vmatpush1.msra.mxu0 0.0
    %816 = vmatprep.subr.mxu0 0.0
    %817 = vmatpush1.msra.mxu0 0.0
    %818 = vmatprep.subr.mxu0 0.0
    %819 = vmatpush1.msra.mxu0 0.0
    %820 = vmatprep.subr.mxu0 0.0
    %821 = vmatpush1.msra.mxu0 0.0
    %822 = vmatprep.subr.mxu0 0.0
    %823 = vmatpush1.msra.mxu0 0.0
    %824 = vmatprep.subr.mxu0 0.0
    %825 = vmatpush1.msra.mxu0 0.0
    %826 = vmatprep.subr.mxu0 0.0
    %827 = vmatpush1.msra.mxu0 0.0
    %828 = vmatprep.subr.mxu0 0.0
    %829 = vmatpush1.msra.mxu0 0.0
    %830 = vmatprep.subr.mxu0 0.0
    %831 = vmatpush1.msra.mxu0 0.0
    %832 = vmatprep.subr.mxu0 0.0
    %833 = vmatpush1.msra.mxu0 0.0
    %834 = vmatprep.subr.mxu0 0.0
    %835 = vmatpush1.msra.mxu0 0.0
    %836 = vmatprep.subr.mxu0 0.0
    %837 = vmatpush1.msra.mxu0 0.0
    %838 = vmatprep.subr.mxu0 0.0
    %839 = vmatpush1.msra.mxu0 0.0
    %840 = vmatprep.subr.mxu0 0.0
    %841 = vmatpush1.msra.mxu0 0.0
    %842 = vmatprep.subr.mxu0 0.0
    %843 = vmatpush1.msra.mxu0 0.0
    %844 = vmatprep.subr.mxu0 0.0
    %845 = vmatpush1.msra.mxu0 0.0
    %846 = vmatprep.subr.mxu0 0.0
    %847 = vmatpush1.msra.mxu0 0.0
    %848 = vmatprep.subr.mxu0 0.0
    %849 = vmatpush1.msra.mxu0 0.0
    %850 = vmatprep.subr.mxu0 0.0
    %851 = vmatpush1.msra.mxu0 0.0
    %852 = vmatprep.subr.mxu0 0.0
    %853 = vmatpush1.msra.mxu0 0.0
    %854 = vmatprep.subr.mxu0 0.0
    %855 = vmatpush1.msra.mxu0 0.0
    %856 = vmatprep.subr.mxu0 0.0
    %857 = vmatpush1.msra.mxu0 0.0
    %858 = vmatprep.subr.mxu0 0.0
    %859 = vmatpush1.msra.mxu0 0.0
    %860 = vmatprep.subr.mxu0 0.0
    %861 = vmatpush1.msra.mxu0 0.0
    %862 = vmatprep.subr.mxu0 0.0
    %863 = vmatpush1.msra.mxu0 0.0
    %864 = vmatprep.mubr.f32.mxu0 0.0
    %865 = vmatmul.mubr.f32.gmra.mrb[0].mxu0 %v798
    %v866 = vpop.f32.mrb[0].mxu0
    %v867 = vadd.f32 0.0, %v866
    %v868 = vpop.f32.mrb[0].mxu0
    %869 = vdwg.mxu0
    %v871 = vsel %vm375, %v722, 0
    %873 = vmatprep.subr.mxu0 0.0
    %874 = vmatpush1.msra.mxu0 %v368
    %875 = vmatprep.subr.mxu0 0.0
    %876 = vmatpush1.msra.mxu0 0.0
    %877 = vmatprep.subr.mxu0 0.0
    %878 = vmatpush1.msra.mxu0 0.0
    %879 = vmatprep.subr.mxu0 0.0
    %880 = vmatpush1.msra.mxu0 0.0
    %881 = vmatprep.subr.mxu0 0.0
    %882 = vmatpush1.msra.mxu0 0.0
    %883 = vmatprep.subr.mxu0 0.0
    %884 = vmatpush1.msra.mxu0 0.0
    %885 = vmatprep.subr.mxu0 0.0
    %886 = vmatpush1.msra.mxu0 0.0
    %887 = vmatprep.subr.mxu0 0.0
    %888 = vmatpush1.msra.mxu0 0.0
    %889 = vmatprep.subr.mxu0 0.0
    %890 = vmatpush1.msra.mxu0 0.0
    %891 = vmatprep.subr.mxu0 0.0
    %892 = vmatpush1.msra.mxu0 0.0
    %893 = vmatprep.subr.mxu0 0.0
    %894 = vmatpush1.msra.mxu0 0.0
    %895 = vmatprep.subr.mxu0 0.0
    %896 = vmatpush1.msra.mxu0 0.0
    %897 = vmatprep.subr.mxu0 0.0
    %898 = vmatpush1.msra.mxu0 0.0
    %899 = vmatprep.subr.mxu0 0.0
    %900 = vmatpush1.msra.mxu0 0.0
    %901 = vmatprep.subr.mxu0 0.0
    %902 = vmatpush1.msra.mxu0 0.0
    %903 = vmatprep.subr.mxu0 0.0
    %904 = vmatpush1.msra.mxu0 0.0
    %905 = vmatprep.subr.mxu0 0.0
    %906 = vmatpush1.msra.mxu0 0.0
    %907 = vmatprep.subr.mxu0 0.0
    %908 = vmatpush1.msra.mxu0 0.0
    %909 = vmatprep.subr.mxu0 0.0
    %910 = vmatpush1.msra.mxu0 0.0
    %911 = vmatprep.subr.mxu0 0.0
    %912 = vmatpush1.msra.mxu0 0.0
    %913 = vmatprep.subr.mxu0 0.0
    %914 = vmatpush1.msra.mxu0 0.0
    %915 = vmatprep.subr.mxu0 0.0
    %916 = vmatpush1.msra.mxu0 0.0
    %917 = vmatprep.subr.mxu0 0.0
    %918 = vmatpush1.msra.mxu0 0.0
    %919 = vmatprep.subr.mxu0 0.0
    %920 = vmatpush1.msra.mxu0 0.0
    %921 = vmatprep.subr.mxu0 0.0
    %922 = vmatpush1.msra.mxu0 0.0
    %923 = vmatprep.subr.mxu0 0.0
    %924 = vmatpush1.msra.mxu0 0.0
    %925 = vmatprep.subr.mxu0 0.0
    %926 = vmatpush1.msra.mxu0 0.0
    %927 = vmatprep.subr.mxu0 0.0
    %928 = vmatpush1.msra.mxu0 0.0
    %929 = vmatprep.subr.mxu0 0.0
    %930 = vmatpush1.msra.mxu0 0.0
    %931 = vmatprep.subr.mxu0 0.0
    %932 = vmatpush1.msra.mxu0 0.0
    %933 = vmatprep.subr.mxu0 0.0
    %934 = vmatpush1.msra.mxu0 0.0
    %935 = vmatprep.subr.mxu0 0.0
    %936 = vmatpush1.msra.mxu0 0.0
    %937 = vmatprep.mubr.f32.mxu0 0.0
    %938 = vmatmul.mubr.f32.gmra.mrb[0].mxu0 %v871
    %v939 = vpop.f32.mrb[0].mxu0
    %v940 = vadd.f32 0.0, %v939
    %v941 = vpop.f32.mrb[0].mxu0
    %942 = vdwg.mxu0
    %v944 = vsel %vm375, %v723, 0
    %946 = vmatprep.subr.mxu0 0.0
    %947 = vmatpush1.msra.mxu0 %v368
    %948 = vmatprep.subr.mxu0 0.0
    %949 = vmatpush1.msra.mxu0 0.0
    %950 = vmatprep.subr.mxu0 0.0
    %951 = vmatpush1.msra.mxu0 0.0
    %952 = vmatprep.subr.mxu0 0.0
    %953 = vmatpush1.msra.mxu0 0.0
    %954 = vmatprep.subr.mxu0 0.0
    %955 = vmatpush1.msra.mxu0 0.0
    %956 = vmatprep.subr.mxu0 0.0
    %957 = vmatpush1.msra.mxu0 0.0
    %958 = vmatprep.subr.mxu0 0.0
    %959 = vmatpush1.msra.mxu0 0.0
    %960 = vmatprep.subr.mxu0 0.0
    %961 = vmatpush1.msra.mxu0 0.0
    %962 = vmatprep.subr.mxu0 0.0
    %963 = vmatpush1.msra.mxu0 0.0
    %964 = vmatprep.subr.mxu0 0.0
    %965 = vmatpush1.msra.mxu0 0.0
    %966 = vmatprep.subr.mxu0 0.0
    %967 = vmatpush1.msra.mxu0 0.0
    %968 = vmatprep.subr.mxu0 0.0
    %969 = vmatpush1.msra.mxu0 0.0
    %970 = vmatprep.subr.mxu0 0.0
    %971 = vmatpush1.msra.mxu0 0.0
    %972 = vmatprep.subr.mxu0 0.0
    %973 = vmatpush1.msra.mxu0 0.0
    %974 = vmatprep.subr.mxu0 0.0
    %975 = vmatpush1.msra.mxu0 0.0
    %976 = vmatprep.subr.mxu0 0.0
    %977 = vmatpush1.msra.mxu0 0.0
    %978 = vmatprep.subr.mxu0 0.0
    %979 = vmatpush1.msra.mxu0 0.0
    %980 = vmatprep.subr.mxu0 0.0
    %981 = vmatpush1.msra.mxu0 0.0
    %982 = vmatprep.subr.mxu0 0.0
    %983 = vmatpush1.msra.mxu0 0.0
    %984 = vmatprep.subr.mxu0 0.0
    %985 = vmatpush1.msra.mxu0 0.0
    %986 = vmatprep.subr.mxu0 0.0
    %987 = vmatpush1.msra.mxu0 0.0
    %988 = vmatprep.subr.mxu0 0.0
    %989 = vmatpush1.msra.mxu0 0.0
    %990 = vmatprep.subr.mxu0 0.0
    %991 = vmatpush1.msra.mxu0 0.0
    %992 = vmatprep.subr.mxu0 0.0
    %993 = vmatpush1.msra.mxu0 0.0
    %994 = vmatprep.subr.mxu0 0.0
    %995 = vmatpush1.msra.mxu0 0.0
    %996 = vmatprep.subr.mxu0 0.0
    %997 = vmatpush1.msra.mxu0 0.0
    %998 = vmatprep.subr.mxu0 0.0
    %999 = vmatpush1.msra.mxu0 0.0
    %1000 = vmatprep.subr.mxu0 0.0
    %1001 = vmatpush1.msra.mxu0 0.0
    %1002 = vmatprep.subr.mxu0 0.0
    %1003 = vmatpush1.msra.mxu0 0.0
    %1004 = vmatprep.subr.mxu0 0.0
    %1005 = vmatpush1.msra.mxu0 0.0
    %1006 = vmatprep.subr.mxu0 0.0
    %1007 = vmatpush1.msra.mxu0 0.0
    %1008 = vmatprep.subr.mxu0 0.0
    %1009 = vmatpush1.msra.mxu0 0.0
    %1010 = vmatprep.mubr.f32.mxu0 0.0
    %1011 = vmatmul.mubr.f32.gmra.mrb[0].mxu0 %v944
    %v1012 = vpop.f32.mrb[0].mxu0
    %v1013 = vadd.f32 0.0, %v1012
    %v1014 = vpop.f32.mrb[0].mxu0
    %1015 = vdwg.mxu0
    %v1016 = vld [vmem:[%s8] sm:$0xff]
    %v1017 = vld [vmem:[%s8 + $0x8] sm:$0xff]
    %v1018 = vld [vmem:[%s8 + $0x10] sm:$0xff]
    %v1019 = vld [vmem:[%s8 + $0x18] sm:$0xff]
    %v1021 = vsel %vm375, %v794, 0
    %1023 = vmatprep.subr.mxu0 0.0
    %1024 = vmatpush1.msra.mxu0 %v1016
    %1025 = vmatprep.subr.mxu0 0.0
    %1026 = vmatpush1.msra.mxu0 0.0
    %1027 = vmatprep.subr.mxu0 0.0
    %1028 = vmatpush1.msra.mxu0 0.0
    %1029 = vmatprep.subr.mxu0 0.0
    %1030 = vmatpush1.msra.mxu0 0.0
    %1031 = vmatprep.subr.mxu0 0.0
    %1032 = vmatpush1.msra.mxu0 0.0
    %1033 = vmatprep.subr.mxu0 0.0
    %1034 = vmatpush1.msra.mxu0 0.0
    %1035 = vmatprep.subr.mxu0 0.0
    %1036 = vmatpush1.msra.mxu0 0.0
    %1037 = vmatprep.subr.mxu0 0.0
    %1038 = vmatpush1.msra.mxu0 0.0
    %1039 = vmatprep.subr.mxu0 0.0
    %1040 = vmatpush1.msra.mxu0 0.0
    %1041 = vmatprep.subr.mxu0 0.0
    %1042 = vmatpush1.msra.mxu0 0.0
    %1043 = vmatprep.subr.mxu0 0.0
    %1044 = vmatpush1.msra.mxu0 0.0
    %1045 = vmatprep.subr.mxu0 0.0
    %1046 = vmatpush1.msra.mxu0 0.0
    %1047 = vmatprep.subr.mxu0 0.0
    %1048 = vmatpush1.msra.mxu0 0.0
    %1049 = vmatprep.subr.mxu0 0.0
    %1050 = vmatpush1.msra.mxu0 0.0
    %1051 = vmatprep.subr.mxu0 0.0
    %1052 = vmatpush1.msra.mxu0 0.0
    %1053 = vmatprep.subr.mxu0 0.0
    %1054 = vmatpush1.msra.mxu0 0.0
    %1055 = vmatprep.subr.mxu0 0.0
    %1056 = vmatpush1.msra.mxu0 0.0
    %1057 = vmatprep.subr.mxu0 0.0
    %1058 = vmatpush1.msra.mxu0 0.0
    %1059 = vmatprep.subr.mxu0 0.0
    %1060 = vmatpush1.msra.mxu0 0.0
    %1061 = vmatprep.subr.mxu0 0.0
    %1062 = vmatpush1.msra.mxu0 0.0
    %1063 = vmatprep.subr.mxu0 0.0
    %1064 = vmatpush1.msra.mxu0 0.0
    %1065 = vmatprep.subr.mxu0 0.0
    %1066 = vmatpush1.msra.mxu0 0.0
    %1067 = vmatprep.subr.mxu0 0.0
    %1068 = vmatpush1.msra.mxu0 0.0
    %1069 = vmatprep.subr.mxu0 0.0
    %1070 = vmatpush1.msra.mxu0 0.0
    %1071 = vmatprep.subr.mxu0 0.0
    %1072 = vmatpush1.msra.mxu0 0.0
    %1073 = vmatprep.subr.mxu0 0.0
    %1074 = vmatpush1.msra.mxu0 0.0
    %1075 = vmatprep.subr.mxu0 0.0
    %1076 = vmatpush1.msra.mxu0 0.0
    %1077 = vmatprep.subr.mxu0 0.0
    %1078 = vmatpush1.msra.mxu0 0.0
    %1079 = vmatprep.subr.mxu0 0.0
    %1080 = vmatpush1.msra.mxu0 0.0
    %1081 = vmatprep.subr.mxu0 0.0
    %1082 = vmatpush1.msra.mxu0 0.0
    %1083 = vmatprep.subr.mxu0 0.0
    %1084 = vmatpush1.msra.mxu0 0.0
    %1085 = vmatprep.subr.mxu0 0.0
    %1086 = vmatpush1.msra.mxu0 0.0
    %1087 = vmatprep.mubr.f32.mxu0 0.0
    %1088 = vmatmul.mubr.f32.gmra.mrb[0].mxu0 %v1021
    %v1089 = vpop.f32.mrb[0].mxu0
    %v1090 = vadd.f32 0.0, %v1089
    %v1091 = vpop.f32.mrb[0].mxu0
    %1092 = vdwg.mxu0
    %v1094 = vsel %vm375, %v867, 0
    %1096 = vmatprep.subr.mxu0 0.0
    %1097 = vmatpush1.msra.mxu0 %v1017
    %1098 = vmatprep.subr.mxu0 0.0
    %1099 = vmatpush1.msra.mxu0 0.0
    %1100 = vmatprep.subr.mxu0 0.0
    %1101 = vmatpush1.msra.mxu0 0.0
    %1102 = vmatprep.subr.mxu0 0.0
    %1103 = vmatpush1.msra.mxu0 0.0
    %1104 = vmatprep.subr.mxu0 0.0
    %1105 = vmatpush1.msra.mxu0 0.0
    %1106 = vmatprep.subr.mxu0 0.0
    %1107 = vmatpush1.msra.mxu0 0.0
    %1108 = vmatprep.subr.mxu0 0.0
    %1109 = vmatpush1.msra.mxu0 0.0
    %1110 = vmatprep.subr.mxu0 0.0
    %1111 = vmatpush1.msra.mxu0 0.0
    %1112 = vmatprep.subr.mxu0 0.0
    %1113 = vmatpush1.msra.mxu0 0.0
    %1114 = vmatprep.subr.mxu0 0.0
    %1115 = vmatpush1.msra.mxu0 0.0
    %1116 = vmatprep.subr.mxu0 0.0
    %1117 = vmatpush1.msra.mxu0 0.0
    %1118 = vmatprep.subr.mxu0 0.0
    %1119 = vmatpush1.msra.mxu0 0.0
    %1120 = vmatprep.subr.mxu0 0.0
    %1121 = vmatpush1.msra.mxu0 0.0
    %1122 = vmatprep.subr.mxu0 0.0
    %1123 = vmatpush1.msra.mxu0 0.0
    %1124 = vmatprep.subr.mxu0 0.0
    %1125 = vmatpush1.msra.mxu0 0.0
    %1126 = vmatprep.subr.mxu0 0.0
    %1127 = vmatpush1.msra.mxu0 0.0
    %1128 = vmatprep.subr.mxu0 0.0
    %1129 = vmatpush1.msra.mxu0 0.0
    %1130 = vmatprep.subr.mxu0 0.0
    %1131 = vmatpush1.msra.mxu0 0.0
    %1132 = vmatprep.subr.mxu0 0.0
    %1133 = vmatpush1.msra.mxu0 0.0
    %1134 = vmatprep.subr.mxu0 0.0
    %1135 = vmatpush1.msra.mxu0 0.0
    %1136 = vmatprep.subr.mxu0 0.0
    %1137 = vmatpush1.msra.mxu0 0.0
    %1138 = vmatprep.subr.mxu0 0.0
    %1139 = vmatpush1.msra.mxu0 0.0
    %1140 = vmatprep.subr.mxu0 0.0
    %1141 = vmatpush1.msra.mxu0 0.0
    %1142 = vmatprep.subr.mxu0 0.0
    %1143 = vmatpush1.msra.mxu0 0.0
    %1144 = vmatprep.subr.mxu0 0.0
    %1145 = vmatpush1.msra.mxu0 0.0
    %1146 = vmatprep.subr.mxu0 0.0
    %1147 = vmatpush1.msra.mxu0 0.0
    %1148 = vmatprep.subr.mxu0 0.0
    %1149 = vmatpush1.msra.mxu0 0.0
    %1150 = vmatprep.subr.mxu0 0.0
    %1151 = vmatpush1.msra.mxu0 0.0
    %1152 = vmatprep.subr.mxu0 0.0
    %1153 = vmatpush1.msra.mxu0 0.0
    %1154 = vmatprep.subr.mxu0 0.0
    %1155 = vmatpush1.msra.mxu0 0.0
    %1156 = vmatprep.subr.mxu0 0.0
    %1157 = vmatpush1.msra.mxu0 0.0
    %1158 = vmatprep.subr.mxu0 0.0
    %1159 = vmatpush1.msra.mxu0 0.0
    %1160 = vmatprep.mubr.f32.mxu0 0.0
    %1161 = vmatmul.mubr.f32.gmra.mrb[0].mxu0 %v1094
    %v1162 = vpop.f32.mrb[0].mxu0
    %v1163 = vadd.f32 0.0, %v1162
    %v1164 = vpop.f32.mrb[0].mxu0
    %1165 = vdwg.mxu0
    %v1167 = vsel %vm375, %v940, 0
    %1169 = vmatprep.subr.mxu0 0.0
    %1170 = vmatpush1.msra.mxu0 %v1018
    %1171 = vmatprep.subr.mxu0 0.0
    %1172 = vmatpush1.msra.mxu0 0.0
    %1173 = vmatprep.subr.mxu0 0.0
    %1174 = vmatpush1.msra.mxu0 0.0
    %1175 = vmatprep.subr.mxu0 0.0
    %1176 = vmatpush1.msra.mxu0 0.0
    %1177 = vmatprep.subr.mxu0 0.0
    %1178 = vmatpush1.msra.mxu0 0.0
    %1179 = vmatprep.subr.mxu0 0.0
    %1180 = vmatpush1.msra.mxu0 0.0
    %1181 = vmatprep.subr.mxu0 0.0
    %1182 = vmatpush1.msra.mxu0 0.0
    %1183 = vmatprep.subr.mxu0 0.0
    %1184 = vmatpush1.msra.mxu0 0.0
    %1185 = vmatprep.subr.mxu0 0.0
    %1186 = vmatpush1.msra.mxu0 0.0
    %1187 = vmatprep.subr.mxu0 0.0
    %1188 = vmatpush1.msra.mxu0 0.0
    %1189 = vmatprep.subr.mxu0 0.0
    %1190 = vmatpush1.msra.mxu0 0.0
    %1191 = vmatprep.subr.mxu0 0.0
    %1192 = vmatpush1.msra.mxu0 0.0
    %1193 = vmatprep.subr.mxu0 0.0
    %1194 = vmatpush1.msra.mxu0 0.0
    %1195 = vmatprep.subr.mxu0 0.0
    %1196 = vmatpush1.msra.mxu0 0.0
    %1197 = vmatprep.subr.mxu0 0.0
    %1198 = vmatpush1.msra.mxu0 0.0
    %1199 = vmatprep.subr.mxu0 0.0
    %1200 = vmatpush1.msra.mxu0 0.0
    %1201 = vmatprep.subr.mxu0 0.0
    %1202 = vmatpush1.msra.mxu0 0.0
    %1203 = vmatprep.subr.mxu0 0.0
    %1204 = vmatpush1.msra.mxu0 0.0
    %1205 = vmatprep.subr.mxu0 0.0
    %1206 = vmatpush1.msra.mxu0 0.0
    %1207 = vmatprep.subr.mxu0 0.0
    %1208 = vmatpush1.msra.mxu0 0.0
    %1209 = vmatprep.subr.mxu0 0.0
    %1210 = vmatpush1.msra.mxu0 0.0
    %1211 = vmatprep.subr.mxu0 0.0
    %1212 = vmatpush1.msra.mxu0 0.0
    %1213 = vmatprep.subr.mxu0 0.0
    %1214 = vmatpush1.msra.mxu0 0.0
    %1215 = vmatprep.subr.mxu0 0.0
    %1216 = vmatpush1.msra.mxu0 0.0
    %1217 = vmatprep.subr.mxu0 0.0
    %1218 = vmatpush1.msra.mxu0 0.0
    %1219 = vmatprep.subr.mxu0 0.0
    %1220 = vmatpush1.msra.mxu0 0.0
    %1221 = vmatprep.subr.mxu0 0.0
    %1222 = vmatpush1.msra.mxu0 0.0
    %1223 = vmatprep.subr.mxu0 0.0
    %1224 = vmatpush1.msra.mxu0 0.0
    %1225 = vmatprep.subr.mxu0 0.0
    %1226 = vmatpush1.msra.mxu0 0.0
    %1227 = vmatprep.subr.mxu0 0.0
    %1228 = vmatpush1.msra.mxu0 0.0
    %1229 = vmatprep.subr.mxu0 0.0
    %1230 = vmatpush1.msra.mxu0 0.0
    %1231 = vmatprep.subr.mxu0 0.0
    %1232 = vmatpush1.msra.mxu0 0.0
    %1233 = vmatprep.mubr.f32.mxu0 0.0
    %1234 = vmatmul.mubr.f32.gmra.mrb[0].mxu0 %v1167
    %v1235 = vpop.f32.mrb[0].mxu0
    %v1236 = vadd.f32 0.0, %v1235
    %v1237 = vpop.f32.mrb[0].mxu0
    %1238 = vdwg.mxu0
    %v1240 = vsel %vm375, %v1013, 0
    %1242 = vmatprep.subr.mxu0 0.0
    %1243 = vmatpush1.msra.mxu0 %v1019
    %1244 = vmatprep.subr.mxu0 0.0
    %1245 = vmatpush1.msra.mxu0 0.0
    %1246 = vmatprep.subr.mxu0 0.0
    %1247 = vmatpush1.msra.mxu0 0.0
    %1248 = vmatprep.subr.mxu0 0.0
    %1249 = vmatpush1.msra.mxu0 0.0
    %1250 = vmatprep.subr.mxu0 0.0
    %1251 = vmatpush1.msra.mxu0 0.0
    %1252 = vmatprep.subr.mxu0 0.0
    %1253 = vmatpush1.msra.mxu0 0.0
    %1254 = vmatprep.subr.mxu0 0.0
    %1255 = vmatpush1.msra.mxu0 0.0
    %1256 = vmatprep.subr.mxu0 0.0
    %1257 = vmatpush1.msra.mxu0 0.0
    %1258 = vmatprep.subr.mxu0 0.0
    %1259 = vmatpush1.msra.mxu0 0.0
    %1260 = vmatprep.subr.mxu0 0.0
    %1261 = vmatpush1.msra.mxu0 0.0
    %1262 = vmatprep.subr.mxu0 0.0
    %1263 = vmatpush1.msra.mxu0 0.0
    %1264 = vmatprep.subr.mxu0 0.0
    %1265 = vmatpush1.msra.mxu0 0.0
    %1266 = vmatprep.subr.mxu0 0.0
    %1267 = vmatpush1.msra.mxu0 0.0
    %1268 = vmatprep.subr.mxu0 0.0
    %1269 = vmatpush1.msra.mxu0 0.0
    %1270 = vmatprep.subr.mxu0 0.0
    %1271 = vmatpush1.msra.mxu0 0.0
    %1272 = vmatprep.subr.mxu0 0.0
    %1273 = vmatpush1.msra.mxu0 0.0
    %1274 = vmatprep.subr.mxu0 0.0
    %1275 = vmatpush1.msra.mxu0 0.0
    %1276 = vmatprep.subr.mxu0 0.0
    %1277 = vmatpush1.msra.mxu0 0.0
    %1278 = vmatprep.subr.mxu0 0.0
    %1279 = vmatpush1.msra.mxu0 0.0
    %1280 = vmatprep.subr.mxu0 0.0
    %1281 = vmatpush1.msra.mxu0 0.0
    %1282 = vmatprep.subr.mxu0 0.0
    %1283 = vmatpush1.msra.mxu0 0.0
    %1284 = vmatprep.subr.mxu0 0.0
    %1285 = vmatpush1.msra.mxu0 0.0
    %1286 = vmatprep.subr.mxu0 0.0
    %1287 = vmatpush1.msra.mxu0 0.0
    %1288 = vmatprep.subr.mxu0 0.0
    %1289 = vmatpush1.msra.mxu0 0.0
    %1290 = vmatprep.subr.mxu0 0.0
    %1291 = vmatpush1.msra.mxu0 0.0
    %1292 = vmatprep.subr.mxu0 0.0
    %1293 = vmatpush1.msra.mxu0 0.0
    %1294 = vmatprep.subr.mxu0 0.0
    %1295 = vmatpush1.msra.mxu0 0.0
    %1296 = vmatprep.subr.mxu0 0.0
    %1297 = vmatpush1.msra.mxu0 0.0
    %1298 = vmatprep.subr.mxu0 0.0
    %1299 = vmatpush1.msra.mxu0 0.0
    %1300 = vmatprep.subr.mxu0 0.0
    %1301 = vmatpush1.msra.mxu0 0.0
    %1302 = vmatprep.subr.mxu0 0.0
    %1303 = vmatpush1.msra.mxu0 0.0
    %1304 = vmatprep.subr.mxu0 0.0
    %1305 = vmatpush1.msra.mxu0 0.0
    %1306 = vmatprep.mubr.f32.mxu0 0.0
    %1307 = vmatmul.mubr.f32.gmra.mrb[0].mxu0 %v1240
    %v1308 = vpop.f32.mrb[0].mxu0
    %v1309 = vadd.f32 0.0, %v1308
    %v1310 = vpop.f32.mrb[0].mxu0
    %1311 = vdwg.mxu0
    %v1312 = vsel %vm47, %v1090, 0.0
    %v1313 = vsel %vm47, %v1163, 0.0
    %v1314 = vadd.f32 %v1312, %v1313
    %v1315 = vsel %vm47, %v1236, 0.0
    %v1316 = vadd.f32 %v1314, %v1315
    %v1317 = vsel %vm47, %v1309, 0.0
    %v1318 = vadd.f32 %v1316, %v1317
    %v1319 = vadd.f32 %v1318, %v45
    %1320 = vst.msk [vmem:[#allocation4] sm:$0xff] %vm47, %v1319
    %v1321 = vmul.f32 %v1319, %v1319
    %v1322 = vsel %vm47, %v1321, 0.0
    %1323 = vadd.xlane.f32.xlu0 %v1322
    %v1324 = vpop.xlane.xlu0 %1323
    %v1325 = vmul.f32 %v1324, %v51
    %v1326 = vadd.f32 %v1325, 1e-06
    %v1327 = vrsqrt.pop %v1326
    %v1328 = vmul.f32 %v1319, %v1327
    %v1329 = vld [vmem:[%s2] sm:$0x1]
    %v1331 = vlaneseq
    %v1332 = vshrl.u32 %v1331, 7
    %v1333 = vsub.s32 0, %v1332
    %v1334 = vrot.slane %v1329, %v1333
    %v1336 = vmul.f32 %v1328, %v1334
    %v1337 = vld [vmem:[%s9] sm:$0xff]
    %v1338 = vld [vmem:[%s9 + $0x8] sm:$0xff]
    %v1339 = vld [vmem:[%s9 + $0x10] sm:$0xff]
    %v1340 = vld [vmem:[%s9 + $0x18] sm:$0xff]
    %v1342 = vsel %vm47, %v1336, 0
    %1344 = vmatprep.subr.mxu0 0.0
    %1345 = vmatpush1.msra.mxu0 %v1337
    %1346 = vmatprep.subr.mxu0 0.0
    %1347 = vmatpush1.msra.mxu0 %v1338
    %1348 = vmatprep.subr.mxu0 0.0
    %1349 = vmatpush1.msra.mxu0 %v1339
    %1350 = vmatprep.subr.mxu0 0.0
    %1351 = vmatpush1.msra.mxu0 %v1340
    %1352 = vmatprep.subr.mxu0 0.0
    %1353 = vmatpush1.msra.mxu0 0.0
    %1354 = vmatprep.subr.mxu0 0.0
    %1355 = vmatpush1.msra.mxu0 0.0
    %1356 = vmatprep.subr.mxu0 0.0
    %1357 = vmatpush1.msra.mxu0 0.0
    %1358 = vmatprep.subr.mxu0 0.0
    %1359 = vmatpush1.msra.mxu0 0.0
    %1360 = vmatprep.subr.mxu0 0.0
    %1361 = vmatpush1.msra.mxu0 0.0
    %1362 = vmatprep.subr.mxu0 0.0
    %1363 = vmatpush1.msra.mxu0 0.0
    %1364 = vmatprep.subr.mxu0 0.0
    %1365 = vmatpush1.msra.mxu0 0.0
    %1366 = vmatprep.subr.mxu0 0.0
    %1367 = vmatpush1.msra.mxu0 0.0
    %1368 = vmatprep.subr.mxu0 0.0
    %1369 = vmatpush1.msra.mxu0 0.0
    %1370 = vmatprep.subr.mxu0 0.0
    %1371 = vmatpush1.msra.mxu0 0.0
    %1372 = vmatprep.subr.mxu0 0.0
    %1373 = vmatpush1.msra.mxu0 0.0
    %1374 = vmatprep.subr.mxu0 0.0
    %1375 = vmatpush1.msra.mxu0 0.0
    %1376 = vmatprep.subr.mxu0 0.0
    %1377 = vmatpush1.msra.mxu0 0.0
    %1378 = vmatprep.subr.mxu0 0.0
    %1379 = vmatpush1.msra.mxu0 0.0
    %1380 = vmatprep.subr.mxu0 0.0
    %1381 = vmatpush1.msra.mxu0 0.0
    %1382 = vmatprep.subr.mxu0 0.0
    %1383 = vmatpush1.msra.mxu0 0.0
    %1384 = vmatprep.subr.mxu0 0.0
    %1385 = vmatpush1.msra.mxu0 0.0
    %1386 = vmatprep.subr.mxu0 0.0
    %1387 = vmatpush1.msra.mxu0 0.0
    %1388 = vmatprep.subr.mxu0 0.0
    %1389 = vmatpush1.msra.mxu0 0.0
    %1390 = vmatprep.subr.mxu0 0.0
    %1391 = vmatpush1.msra.mxu0 0.0
    %1392 = vmatprep.subr.mxu0 0.0
    %1393 = vmatpush1.msra.mxu0 0.0
    %1394 = vmatprep.subr.mxu0 0.0
    %1395 = vmatpush1.msra.mxu0 0.0
    %1396 = vmatprep.subr.mxu0 0.0
    %1397 = vmatpush1.msra.mxu0 0.0
    %1398 = vmatprep.subr.mxu0 0.0
    %1399 = vmatpush1.msra.mxu0 0.0
    %1400 = vmatprep.subr.mxu0 0.0
    %1401 = vmatpush1.msra.mxu0 0.0
    %1402 = vmatprep.subr.mxu0 0.0
    %1403 = vmatpush1.msra.mxu0 0.0
    %1404 = vmatprep.subr.mxu0 0.0
    %1405 = vmatpush1.msra.mxu0 0.0
    %1406 = vmatprep.subr.mxu0 0.0
    %1407 = vmatpush1.msra.mxu0 0.0
    %1408 = vmatprep.mubr.f32.mxu0 0.0
    %1409 = vmatmul.mubr.f32.gmra.mrb[0].mxu0 %v1342
    %v1410 = vpop.f32.mrb[0].mxu0
    %v1411 = vadd.f32 0.0, %v1410
    %v1412 = vpop.f32.mrb[0].mxu0
    %1413 = vdwg.mxu0
    %v1414 = vld [vmem:[%s10] sm:$0xff]
    %v1415 = vld [vmem:[%s10 + $0x8] sm:$0xff]
    %v1416 = vld [vmem:[%s10 + $0x10] sm:$0xff]
    %v1417 = vld [vmem:[%s10 + $0x18] sm:$0xff]
    %1418 = vmatprep.subr.mxu0 0.0
    %1419 = vmatpush1.msra.mxu0 %v1414
    %1420 = vmatprep.subr.mxu0 0.0
    %1421 = vmatpush1.msra.mxu0 %v1415
    %1422 = vmatprep.subr.mxu0 0.0
    %1423 = vmatpush1.msra.mxu0 %v1416
    %1424 = vmatprep.subr.mxu0 0.0
    %1425 = vmatpush1.msra.mxu0 %v1417
    %1426 = vmatprep.subr.mxu0 0.0
    %1427 = vmatpush1.msra.mxu0 0.0
    %1428 = vmatprep.subr.mxu0 0.0
    %1429 = vmatpush1.msra.mxu0 0.0
    %1430 = vmatprep.subr.mxu0 0.0
    %1431 = vmatpush1.msra.mxu0 0.0
    %1432 = vmatprep.subr.mxu0 0.0
    %1433 = vmatpush1.msra.mxu0 0.0
    %1434 = vmatprep.subr.mxu0 0.0
    %1435 = vmatpush1.msra.mxu0 0.0
    %1436 = vmatprep.subr.mxu0 0.0
    %1437 = vmatpush1.msra.mxu0 0.0
    %1438 = vmatprep.subr.mxu0 0.0
    %1439 = vmatpush1.msra.mxu0 0.0
    %1440 = vmatprep.subr.mxu0 0.0
    %1441 = vmatpush1.msra.mxu0 0.0
    %1442 = vmatprep.subr.mxu0 0.0
    %1443 = vmatpush1.msra.mxu0 0.0
    %1444 = vmatprep.subr.mxu0 0.0
    %1445 = vmatpush1.msra.mxu0 0.0
    %1446 = vmatprep.subr.mxu0 0.0
    %1447 = vmatpush1.msra.mxu0 0.0
    %1448 = vmatprep.subr.mxu0 0.0
    %1449 = vmatpush1.msra.mxu0 0.0
    %1450 = vmatprep.subr.mxu0 0.0
    %1451 = vmatpush1.msra.mxu0 0.0
    %1452 = vmatprep.subr.mxu0 0.0
    %1453 = vmatpush1.msra.mxu0 0.0
    %1454 = vmatprep.subr.mxu0 0.0
    %1455 = vmatpush1.msra.mxu0 0.0
    %1456 = vmatprep.subr.mxu0 0.0
    %1457 = vmatpush1.msra.mxu0 0.0
    %1458 = vmatprep.subr.mxu0 0.0
    %1459 = vmatpush1.msra.mxu0 0.0
    %1460 = vmatprep.subr.mxu0 0.0
    %1461 = vmatpush1.msra.mxu0 0.0
    %1462 = vmatprep.subr.mxu0 0.0
    %1463 = vmatpush1.msra.mxu0 0.0
    %1464 = vmatprep.subr.mxu0 0.0
    %1465 = vmatpush1.msra.mxu0 0.0
    %1466 = vmatprep.subr.mxu0 0.0
    %1467 = vmatpush1.msra.mxu0 0.0
    %1468 = vmatprep.subr.mxu0 0.0
    %1469 = vmatpush1.msra.mxu0 0.0
    %1470 = vmatprep.subr.mxu0 0.0
    %1471 = vmatpush1.msra.mxu0 0.0
    %1472 = vmatprep.subr.mxu0 0.0
    %1473 = vmatpush1.msra.mxu0 0.0
    %1474 = vmatprep.subr.mxu0 0.0
    %1475 = vmatpush1.msra.mxu0 0.0
    %1476 = vmatprep.subr.mxu0 0.0
    %1477 = vmatpush1.msra.mxu0 0.0
    %1478 = vmatprep.subr.mxu0 0.0
    %1479 = vmatpush1.msra.mxu0 0.0
    %1480 = vmatprep.subr.mxu0 0.0
    %1481 = vmatpush1.msra.mxu0 0.0
    %1482 = vmatprep.mubr.f32.mxu0 0.0
    %1483 = vmatmul.mubr.f32.gmra.mrb[0].mxu0 %v1342
    %v1484 = vpop.f32.mrb[0].mxu0
    %v1485 = vadd.f32 0.0, %v1484
    %v1486 = vpop.f32.mrb[0].mxu0
    %1487 = vdwg.mxu0
    %v1488 = vxor.u32 %v1411, 2147483648
    %v1489 = vmul.f32 %v1488, 1.442695
    %v1490 = vpow.pop %v1489
    %v1491 = vadd.f32 %v1490, 1.0
    %v1492 = vrcp.pop %v1491
    %v1493 = vmul.f32 1.0, %v1492
    %v1494 = vmul.f32 %v1411, %v1493
    %v1495 = vmul.f32 %v1494, %v1485
    %v1496 = vld [vmem:[%s11] sm:$0xff]
    %v1497 = vld [vmem:[%s11 + $0x8] sm:$0xff]
    %v1498 = vld [vmem:[%s11 + $0x10] sm:$0xff]
    %v1499 = vld [vmem:[%s11 + $0x18] sm:$0xff]
    %v1500 = vld [vmem:[%s11 + $0x20] sm:$0xff]
    %v1501 = vld [vmem:[%s11 + $0x28] sm:$0xff]
    %v1502 = vld [vmem:[%s11 + $0x30] sm:$0xff]
    %v1503 = vld [vmem:[%s11 + $0x38] sm:$0xff]
    %vm1504 = vcmask 523264
    %v1506 = vsel %vm1504, %v1495, 0
    %1508 = vmatprep.subr.mxu0 0.0
    %1509 = vmatpush1.msra.mxu0 %v1496
    %1510 = vmatprep.subr.mxu0 0.0
    %1511 = vmatpush1.msra.mxu0 %v1497
    %1512 = vmatprep.subr.mxu0 0.0
    %1513 = vmatpush1.msra.mxu0 %v1498
    %1514 = vmatprep.subr.mxu0 0.0
    %1515 = vmatpush1.msra.mxu0 %v1499
    %1516 = vmatprep.subr.mxu0 0.0
    %1517 = vmatpush1.msra.mxu0 %v1500
    %1518 = vmatprep.subr.mxu0 0.0
    %1519 = vmatpush1.msra.mxu0 %v1501
    %1520 = vmatprep.subr.mxu0 0.0
    %1521 = vmatpush1.msra.mxu0 %v1502
    %1522 = vmatprep.subr.mxu0 0.0
    %1523 = vmatpush1.msra.mxu0 %v1503
    %1524 = vmatprep.subr.mxu0 0.0
    %1525 = vmatpush1.msra.mxu0 0.0
    %1526 = vmatprep.subr.mxu0 0.0
    %1527 = vmatpush1.msra.mxu0 0.0
    %1528 = vmatprep.subr.mxu0 0.0
    %1529 = vmatpush1.msra.mxu0 0.0
    %1530 = vmatprep.subr.mxu0 0.0
    %1531 = vmatpush1.msra.mxu0 0.0
    %1532 = vmatprep.subr.mxu0 0.0
    %1533 = vmatpush1.msra.mxu0 0.0
    %1534 = vmatprep.subr.mxu0 0.0
    %1535 = vmatpush1.msra.mxu0 0.0
    %1536 = vmatprep.subr.mxu0 0.0
    %1537 = vmatpush1.msra.mxu0 0.0
    %1538 = vmatprep.subr.mxu0 0.0
    %1539 = vmatpush1.msra.mxu0 0.0
    %1540 = vmatprep.subr.mxu0 0.0
    %1541 = vmatpush1.msra.mxu0 0.0
    %1542 = vmatprep.subr.mxu0 0.0
    %1543 = vmatpush1.msra.mxu0 0.0
    %1544 = vmatprep.subr.mxu0 0.0
    %1545 = vmatpush1.msra.mxu0 0.0
    %1546 = vmatprep.subr.mxu0 0.0
    %1547 = vmatpush1.msra.mxu0 0.0
    %1548 = vmatprep.subr.mxu0 0.0
    %1549 = vmatpush1.msra.mxu0 0.0
    %1550 = vmatprep.subr.mxu0 0.0
    %1551 = vmatpush1.msra.mxu0 0.0
    %1552 = vmatprep.subr.mxu0 0.0
    %1553 = vmatpush1.msra.mxu0 0.0
    %1554 = vmatprep.subr.mxu0 0.0
    %1555 = vmatpush1.msra.mxu0 0.0
    %1556 = vmatprep.subr.mxu0 0.0
    %1557 = vmatpush1.msra.mxu0 0.0
    %1558 = vmatprep.subr.mxu0 0.0
    %1559 = vmatpush1.msra.mxu0 0.0
    %1560 = vmatprep.subr.mxu0 0.0
    %1561 = vmatpush1.msra.mxu0 0.0
    %1562 = vmatprep.subr.mxu0 0.0
    %1563 = vmatpush1.msra.mxu0 0.0
    %1564 = vmatprep.subr.mxu0 0.0
    %1565 = vmatpush1.msra.mxu0 0.0
    %1566 = vmatprep.subr.mxu0 0.0
    %1567 = vmatpush1.msra.mxu0 0.0
    %1568 = vmatprep.subr.mxu0 0.0
    %1569 = vmatpush1.msra.mxu0 0.0
    %1570 = vmatprep.subr.mxu0 0.0
    %1571 = vmatpush1.msra.mxu0 0.0
    %1572 = vmatprep.mubr.f32.mxu0 0.0
    %1573 = vmatmul.mubr.f32.gmra.mrb[0].mxu0 %v1506
    %v1574 = vpop.f32.mrb[0].mxu0
    %v1575 = vadd.f32 0.0, %v1574
    %v1576 = vpop.f32.mrb[0].mxu0
    %1577 = vdwg.mxu0
    %1578 = vst.msk [vmem:[#allocation2] sm:$0xff] %vm47, %v1575
    // Predicated region
    $region50: #{tpu_custom_call.1} parent=1 // pred_check
      _
    $region51: #{tpu_custom_call.1} parent=1 // pred_check_branch
      %1580 = sbr.rel (0) target = $region53
    $region52: #{tpu_custom_call.1} parent=1 // pred_region
      %s1582 = ssub.s32 128, 128
      %1583 = vsyncadd [#allocation3], %s1582
      %s1585 = sshll.u32 [#allocation2], 4
      %s1586 = int_to_ptr.vmem [resolvable:$true] %s1585
      %1588 = dma.vmem_to_hbm [thread:$0]  %s1586, 128, %s12, [#allocation3]
    $region53: #{tpu_custom_call.1} parent=1 // pred_fallthru
      _
    // Predicated region
    $region54: #{tpu_custom_call.1} parent=1 // pred_check
      _
    $region55: #{tpu_custom_call.1} parent=1 // pred_check_branch
      %1590 = sbr.rel (0) target = $region57
    $region56: #{tpu_custom_call.1} parent=1 // pred_region
      %s1592 = ssub.s32 128, 128
      %1593 = vsyncadd [#allocation5], %s1592
      %s1595 = sshll.u32 [#allocation4], 4
      %s1596 = int_to_ptr.vmem [resolvable:$true] %s1595
      %1598 = dma.vmem_to_hbm [thread:$0]  %s1596, 128, %s13, [#allocation5]
    $region57: #{tpu_custom_call.1} parent=1 // pred_fallthru
      _
    // Predicated region
    $region58: #{tpu_custom_call.1} parent=1 // pred_check
      _
    $region59: #{tpu_custom_call.1} parent=1 // pred_check_branch
      %1600 = sbr.rel (0) target = $region61
    $region60: #{tpu_custom_call.1} parent=1 // pred_region
      %1601 = dma.done [#allocation3], 128
    $region61: #{tpu_custom_call.1} parent=1 // pred_fallthru
      _
    // Predicated region
    $region62: #{tpu_custom_call.1} parent=1 // pred_check
      _
    $region63: #{tpu_custom_call.1} parent=1 // pred_check_branch
      %1603 = sbr.rel (0) target = $region65
    $region64: #{tpu_custom_call.1} parent=1 // pred_region
      %1604 = dma.done [#allocation5], 128
    $region65: #{tpu_custom_call.1} parent=1 // pred_fallthru
      _
    %1605 = vsyncpa [#allocation3], 1
    %1606 = vsyncpa [#allocation5], 1

</llo_original>
